<compile_context>
chip_gen: v5e
topology: v5e:2x2
jax: 0.10.0
libtpu: 0.0.40
codegen_flags: <defaults>
</compile_context>

<pallas_src>
import numpy as np
import jax
import jax.numpy as jnp
from jax.experimental import pallas as pl
from jax.experimental.pallas import tpu as pltpu


def _round_up(x, m):
    return (x + m - 1) // m * m


# --------------------------------------------------------------------------
# Kernel: one grid step processes `tm` rays (lanes); weights stay resident.
# --------------------------------------------------------------------------
def _mlp_render_fea_kernel(x_ref, e_ref, w1t_ref, w1r_ref, w2_ref, b2_ref,
                           w3_ref, b3_ref, o_ref):
    f32 = jnp.float32
    cdt = w1t_ref.dtype                    # bf16 compute dtype, f32 accumulate

    x = x_ref[...].astype(f32)                                   # (k_raw, tm)

    # Positional-encoding pre-activations.  Kept f32: sin/cos arguments reach
    # |x| * 2**(freqs-1) and need full argument precision; the pi/2 phase for
    # the cos rows is carried by the `ones` row of x.
    args = jnp.dot(e_ref[...], x, preferred_element_type=f32)    # (pe_pad, tm)
    trig = jnp.sin(args)

    # Layer 1: trig part + raw [feat|view|1] part (b1 folded via the ones row).
    h1 = (jnp.dot(w1t_ref[...], trig.astype(cdt), preferred_element_type=f32)
          + jnp.dot(w1r_ref[...], x.astype(cdt), preferred_element_type=f32))
    h1 = jnp.maximum(h1, 0.0)                                    # (featureC, tm)

    h2 = jnp.dot(w2_ref[...], h1.astype(cdt), preferred_element_type=f32) + b2_ref[...]
    h2 = jnp.maximum(h2, 0.0)

    out = jnp.dot(w3_ref[...], h2.astype(cdt), preferred_element_type=f32) + b3_ref[...]
    o_ref[...] = jax.nn.sigmoid(out).astype(o_ref.dtype)         # (3, tm)


# --------------------------------------------------------------------------
# Wrapper-side weight / encoding fusion
# --------------------------------------------------------------------------
def _encode_matrix_T(C, feape, viewpe, k_raw):
    """E (pe_pad, k_raw) such that sin(E @ [feat|view|1|0pad]^T) reproduces
    [sin(pe_f), cos(pe_f), sin(pe_v), cos(pe_v)] rows in PyTorch's
    channel-major, freq-minor ordering (cos = sin(x + pi/2))."""
    in_raw = C + 3
    pe_w = 2 * C * feape + 2 * 3 * viewpe
    pe_pad = _round_up(pe_w, 8)
    e = np.zeros((pe_pad, k_raw), np.float32)
    row = 0
    for chans, base, nf in ((C, 0, feape), (3, C, viewpe)):
        for is_cos in (False, True):
            for c in range(chans):
                for f in range(nf):
                    e[row, base + c] = 2.0 ** f
                    if is_cos:
                        e[row, in_raw] = np.pi / 2
                    row += 1
    return e, pe_w, pe_pad


def init_params(key, in_chanel, viewpe=6, feape=6, featureC=128):
    """Deterministic PyTorch-Linear-style init (uniform +-1/sqrt(fan_in))."""
    in_mlpC = 2 * viewpe * 3 + 2 * feape * in_chanel + 3 + in_chanel
    ks = jax.random.split(key, 6)

    def lin(kw, kb, fan_in, fan_out):
        bound = 1.0 / np.sqrt(fan_in)
        w = jax.random.uniform(kw, (fan_in, fan_out), jnp.float32, -bound, bound)
        b = jax.random.uniform(kb, (fan_out,), jnp.float32, -bound, bound)
        return w, b

    w1, b1 = lin(ks[0], ks[1], in_mlpC, featureC)
    w2, b2 = lin(ks[2], ks[3], featureC, featureC)
    w3, _ = lin(ks[4], ks[5], featureC, 3)
    b3 = jnp.zeros((3,), jnp.float32)   # torch.nn.init.constant_(mlp[-1].bias, 0)
    return dict(w1=w1, b1=b1, w2=w2, b2=b2, w3=w3, b3=b3)


def mlp_render_fea_forward(params, pts, viewdirs, features,
                           viewpe=6, feape=6, tm=2048,
                           compute_dtype=jnp.bfloat16):
    del pts  # unused in the reference forward, kept for signature parity
    f32 = jnp.float32
    N, C = features.shape
    featureC = params["w1"].shape[1]
    in_raw = C + 3
    k_raw = _round_up(in_raw + 1, 8)               # raw channels + ones column
    e_np, pe_w, pe_pad = _encode_matrix_T(C, feape, viewpe, k_raw)

    w1 = params["w1"].astype(f32)
    b1 = params["b1"].astype(f32)
    # Layer-1 weights, transposed to (out, in): trig columns and raw columns
    # (+ b1 on the ones column) as two resident bf16 matrices.
    w1t = jnp.concatenate(
        [w1[in_raw:].T, jnp.zeros((featureC, pe_pad - pe_w), f32)],
        axis=1).astype(compute_dtype)                              # (featureC, pe_pad)
    w1r = jnp.concatenate(
        [w1[:in_raw].T, b1[:, None],
         jnp.zeros((featureC, k_raw - in_raw - 1), f32)],
        axis=1).astype(compute_dtype)                              # (featureC, k_raw)
    w2 = params["w2"].T.astype(compute_dtype)                      # (featureC, featureC)
    w3 = params["w3"].T.astype(compute_dtype)                      # (3, featureC)
    b2 = params["b2"].astype(f32)[:, None]                         # (featureC, 1)
    b3 = params["b3"].astype(f32)[:, None]                         # (3, 1)
    eT = jnp.asarray(e_np)                                         # (pe_pad, k_raw)

    # Rays on the lane axis: transposed input [feat | view | 1 | 0pad] -> (k_raw, N).
    xT = jnp.concatenate(
        [features.T.astype(f32), viewdirs.T.astype(f32),
         jnp.ones((1, N), f32), jnp.zeros((k_raw - in_raw - 1, N), f32)], axis=0)

    # Tile choice: big tiles (default 2048 rays) to amortize the ~0.35us/step
    # overhead, an even grid so both v7x TensorCores get equal work under the
    # "parallel" axis, and the lane dim kept a multiple of 128.
    tm_req = max(128, _round_up(tm, 128))
    g = max(2, 2 * pl.cdiv(N, 2 * tm_req))         # even number of grid steps
    tm = min(tm_req, _round_up(pl.cdiv(N, g), 128))
    Np = g * tm
    xT = jnp.pad(xT, ((0, 0), (0, Np - N)))

    w_bytes = int(eT.size * 4 + (w1t.size + w1r.size + w2.size + w3.size) * 2
                  + (b2.size + b3.size) * 4)
    cost = pl.CostEstimate(
        flops=2 * Np * (k_raw * pe_pad + pe_pad * featureC + k_raw * featureC
                        + featureC * featureC + featureC * 3),
        transcendentals=Np * (pe_pad + 3),
        bytes_accessed=Np * (k_raw + 3) * 4 + w_bytes,
    )

    resident = lambda a: pl.BlockSpec(a.shape, lambda i: (0, 0))

    out = pl.pallas_call(
        _mlp_render_fea_kernel,
        out_shape=jax.ShapeDtypeStruct((3, Np), features.dtype),
        grid_spec=pltpu.PrefetchScalarGridSpec(
            num_scalar_prefetch=0,
            grid=(g,),
            in_specs=[
                pl.BlockSpec((k_raw, tm), lambda i: (0, i)),   # per-ray inputs
                resident(eT), resident(w1t), resident(w1r), resident(w2),
                resident(b2), resident(w3), resident(b3),
            ],
            out_specs=pl.BlockSpec((3, tm), lambda i: (0, i)),
        ),
        compiler_params=pltpu.CompilerParams(
            dimension_semantics=("parallel",),
            vmem_limit_bytes=32 * 1024 * 1024),
        cost_estimate=cost,
    )(xT, eT, w1t, w1r, w2, b2, w3, b3)

    return out[:, :N].T                                           # (N, 3)


# ---------------- pure-JAX reference (mirrors the PyTorch module) ----------------
def _positional_encoding_ref(positions, freqs):
    freq_bands = 2.0 ** jnp.arange(freqs, dtype=jnp.float32)
    pts = (positions[..., None] * freq_bands).reshape(
        positions.shape[:-1] + (freqs * positions.shape[-1],))
    return jnp.concatenate([jnp.sin(pts), jnp.cos(pts)], axis=-1)


def _reference_forward(params, pts, viewdirs, features, viewpe=6, feape=6):
    del pts
    hp = jax.lax.Precision.HIGHEST
    indata = [features, viewdirs,
              _positional_encoding_ref(features, feape),
              _positional_encoding_ref(viewdirs, viewpe)]
    x = jnp.concatenate(indata, axis=-1)
    h = jnp.maximum(jnp.dot(x, params["w1"], precision=hp) + params["b1"], 0.0)
    h = jnp.maximum(jnp.dot(h, params["w2"], precision=hp) + params["b2"], 0.0)
    return jax.nn.sigmoid(jnp.dot(h, params["w3"], precision=hp) + params["b3"])


if __name__ == "__main__":
    in_chanel, viewpe, feape, featureC = 4, 6, 6, 128
    N = 256

    key = jax.random.PRNGKey(0)
    k1, k2, k3, kp = jax.random.split(key, 4)
    features = jax.random.normal(k1, (N, in_chanel), jnp.float32)
    viewdirs = jax.random.normal(k2, (N, 3), jnp.float32)
    viewdirs = viewdirs / jnp.linalg.norm(viewdirs, axis=-1, keepdims=True)
    pts = jax.random.normal(k3, (N, 3), jnp.float32)

    params = init_params(kp, in_chanel, viewpe, feape, featureC)

    rgb = mlp_render_fea_forward(params, pts, viewdirs, features, viewpe, feape)
    rgb = jax.block_until_ready(rgb)

    ref = _reference_forward(params, pts, viewdirs, features, viewpe, feape)
    assert rgb.shape == (N, 3) and rgb.dtype == jnp.float32
    # bf16 MXU operands (f32 accumulation) => relaxed tolerance vs. the
    # precision=HIGHEST f32 reference; sigmoid outputs are in [0, 1].
    np.testing.assert_allclose(np.asarray(rgb), np.asarray(ref), atol=2e-2, rtol=2e-2)
    print("KERNEL_OK")
</pallas_src>

<mosaic_0001>
module attributes {stable_mosaic.version = 11 : i64} {
  func.func @_mlp_render_fea_kernel(%arg0: i32, %arg1: memref<8x128xf32, #tpu.memory_space<vmem>>, %arg2: memref<88x8xf32, #tpu.memory_space<vmem>>, %arg3: memref<128x88xbf16, #tpu.memory_space<vmem>>, %arg4: memref<128x8xbf16, #tpu.memory_space<vmem>>, %arg5: memref<128x128xbf16, #tpu.memory_space<vmem>>, %arg6: memref<128x1xf32, #tpu.memory_space<vmem>>, %arg7: memref<3x128xbf16, #tpu.memory_space<vmem>>, %arg8: memref<3x1xf32, #tpu.memory_space<vmem>>, %arg9: memref<3x128xf32, #tpu.memory_space<vmem>>) attributes {dimension_semantics = [#tpu.dimension_semantics<parallel>], iteration_bounds = array<i64: 2>, scalar_prefetch = 0 : i64, scratch_operands = 0 : i64, tpu.core_type = #tpu.core_type<tc>, window_params = [{transform_indices = @transform_0, window_bounds = array<i64: 8, 128>}, {pipeline_mode = #tpu.pipeline_mode<synchronous>, transform_indices = @transform_1, window_bounds = array<i64: 88, 8>}, {pipeline_mode = #tpu.pipeline_mode<synchronous>, transform_indices = @transform_2, window_bounds = array<i64: 128, 88>}, {pipeline_mode = #tpu.pipeline_mode<synchronous>, transform_indices = @transform_3, window_bounds = array<i64: 128, 8>}, {pipeline_mode = #tpu.pipeline_mode<synchronous>, transform_indices = @transform_4, window_bounds = array<i64: 128, 128>}, {pipeline_mode = #tpu.pipeline_mode<synchronous>, transform_indices = @transform_5, window_bounds = array<i64: 128, 1>}, {pipeline_mode = #tpu.pipeline_mode<synchronous>, transform_indices = @transform_6, window_bounds = array<i64: 3, 128>}, {pipeline_mode = #tpu.pipeline_mode<synchronous>, transform_indices = @transform_7, window_bounds = array<i64: 3, 1>}, {transform_indices = @transform_8, window_bounds = array<i64: 3, 128>}]} {
    %c0 = arith.constant 0 : index
    %c0_0 = arith.constant 0 : index
    %0 = vector.load %arg1[%c0, %c0_0] : memref<8x128xf32, #tpu.memory_space<vmem>>, vector<8x128xf32>
    %c0_1 = arith.constant 0 : index
    %c0_2 = arith.constant 0 : index
    %1 = vector.load %arg2[%c0_1, %c0_2] : memref<88x8xf32, #tpu.memory_space<vmem>>, vector<88x8xf32>
    %cst = arith.constant dense<0.000000e+00> : vector<88x128xf32>
    %2 = tpu.matmul %1, %0, %cst {dimension_numbers = #tpu.dot_dimension_numbers<[1], [0], [0], [1], [0, 0, 1, 1], [], []>} : vector<88x8xf32>, vector<8x128xf32>, vector<88x128xf32> -> vector<88x128xf32>
    %3 = math.sin %2 : vector<88x128xf32>
    %c0_3 = arith.constant 0 : index
    %c0_4 = arith.constant 0 : index
    %4 = vector.load %arg3[%c0_3, %c0_4] : memref<128x88xbf16, #tpu.memory_space<vmem>>, vector<128x88xbf16>
    %5 = arith.truncf %3 : vector<88x128xf32> to vector<88x128xbf16>
    %cst_5 = arith.constant dense<0.000000e+00> : vector<128x128xf32>
    %6 = tpu.matmul %4, %5, %cst_5 {dimension_numbers = #tpu.dot_dimension_numbers<[1], [0], [0], [1], [0, 0, 1, 1], [], []>} : vector<128x88xbf16>, vector<88x128xbf16>, vector<128x128xf32> -> vector<128x128xf32>
    %c0_6 = arith.constant 0 : index
    %c0_7 = arith.constant 0 : index
    %7 = vector.load %arg4[%c0_6, %c0_7] : memref<128x8xbf16, #tpu.memory_space<vmem>>, vector<128x8xbf16>
    %8 = arith.truncf %0 : vector<8x128xf32> to vector<8x128xbf16>
    %cst_8 = arith.constant dense<0.000000e+00> : vector<128x128xf32>
    %9 = tpu.matmul %7, %8, %cst_8 {dimension_numbers = #tpu.dot_dimension_numbers<[1], [0], [0], [1], [0, 0, 1, 1], [], []>} : vector<128x8xbf16>, vector<8x128xbf16>, vector<128x128xf32> -> vector<128x128xf32>
    %10 = arith.addf %6, %9 : vector<128x128xf32>
    %cst_9 = arith.constant 0.000000e+00 : f32
    %11 = vector.broadcast %cst_9 : f32 to vector<128x128xf32>
    %12 = arith.maximumf %10, %11 : vector<128x128xf32>
    %c0_10 = arith.constant 0 : index
    %c0_11 = arith.constant 0 : index
    %13 = vector.load %arg5[%c0_10, %c0_11] : memref<128x128xbf16, #tpu.memory_space<vmem>>, vector<128x128xbf16>
    %14 = arith.truncf %12 : vector<128x128xf32> to vector<128x128xbf16>
    %cst_12 = arith.constant dense<0.000000e+00> : vector<128x128xf32>
    %15 = tpu.matmul %13, %14, %cst_12 {dimension_numbers = #tpu.dot_dimension_numbers<[1], [0], [0], [1], [0, 0, 1, 1], [], []>} : vector<128x128xbf16>, vector<128x128xbf16>, vector<128x128xf32> -> vector<128x128xf32>
    %c0_13 = arith.constant 0 : index
    %c0_14 = arith.constant 0 : index
    %16 = vector.load %arg6[%c0_13, %c0_14] : memref<128x1xf32, #tpu.memory_space<vmem>>, vector<128x1xf32>
    %17 = vector.broadcast %16 : vector<128x1xf32> to vector<128x128xf32>
    %18 = arith.addf %15, %17 : vector<128x128xf32>
    %cst_15 = arith.constant 0.000000e+00 : f32
    %19 = vector.broadcast %cst_15 : f32 to vector<128x128xf32>
    %20 = arith.maximumf %18, %19 : vector<128x128xf32>
    %c0_16 = arith.constant 0 : index
    %c0_17 = arith.constant 0 : index
    %21 = vector.load %arg7[%c0_16, %c0_17] : memref<3x128xbf16, #tpu.memory_space<vmem>>, vector<3x128xbf16>
    %22 = arith.truncf %20 : vector<128x128xf32> to vector<128x128xbf16>
    %cst_18 = arith.constant dense<0.000000e+00> : vector<3x128xf32>
    %23 = tpu.matmul %21, %22, %cst_18 {dimension_numbers = #tpu.dot_dimension_numbers<[1], [0], [0], [1], [0, 0, 1, 1], [], []>} : vector<3x128xbf16>, vector<128x128xbf16>, vector<3x128xf32> -> vector<3x128xf32>
    %c0_19 = arith.constant 0 : index
    %c0_20 = arith.constant 0 : index
    %24 = vector.load %arg8[%c0_19, %c0_20] : memref<3x1xf32, #tpu.memory_space<vmem>>, vector<3x1xf32>
    %25 = vector.broadcast %24 : vector<3x1xf32> to vector<3x128xf32>
    %26 = arith.addf %23, %25 : vector<3x128xf32>
    %27 = arith.negf %26 : vector<3x128xf32>
    %28 = math.exp %27 : vector<3x128xf32>
    %cst_21 = arith.constant 1.000000e+00 : f32
    %29 = vector.broadcast %cst_21 : f32 to vector<3x128xf32>
    %30 = arith.addf %29, %28 : vector<3x128xf32>
    %31 = arith.divf %29, %30 : vector<3x128xf32>
    %c0_22 = arith.constant 0 : index
    %c0_23 = arith.constant 0 : index
    %32 = vector.load %arg9[%c0_22, %c0_23] : memref<3x128xf32, #tpu.memory_space<vmem>>, vector<3x128xf32>
    tpu.vector_store %arg9[%c0_22, %c0_23], %31 {strides = array<i32>} : memref<3x128xf32, #tpu.memory_space<vmem>>, vector<3x128xf32>,
    return
  }
  func.func @transform_0(%arg0: i32) -> (i32, i32) {
    %c0_i32 = arith.constant 0 : i32
    %c0_i32_0 = arith.constant 0 : i32
    return %c0_i32, %arg0 : i32, i32
  }
  func.func @transform_1(%arg0: i32) -> (i32, i32) {
    %c0_i32 = arith.constant 0 : i32
    %c0_i32_0 = arith.constant 0 : i32
    %c0_i32_1 = arith.constant 0 : i32
    return %c0_i32, %c0_i32_0 : i32, i32
  }
  func.func @transform_2(%arg0: i32) -> (i32, i32) {
    %c0_i32 = arith.constant 0 : i32
    %c0_i32_0 = arith.constant 0 : i32
    %c0_i32_1 = arith.constant 0 : i32
    return %c0_i32, %c0_i32_0 : i32, i32
  }
  func.func @transform_3(%arg0: i32) -> (i32, i32) {
    %c0_i32 = arith.constant 0 : i32
    %c0_i32_0 = arith.constant 0 : i32
    %c0_i32_1 = arith.constant 0 : i32
    return %c0_i32, %c0_i32_0 : i32, i32
  }
  func.func @transform_4(%arg0: i32) -> (i32, i32) {
    %c0_i32 = arith.constant 0 : i32
    %c0_i32_0 = arith.constant 0 : i32
    %c0_i32_1 = arith.constant 0 : i32
    return %c0_i32, %c0_i32_0 : i32, i32
  }
  func.func @transform_5(%arg0: i32) -> (i32, i32) {
    %c0_i32 = arith.constant 0 : i32
    %c0_i32_0 = arith.constant 0 : i32
    %c0_i32_1 = arith.constant 0 : i32
    return %c0_i32, %c0_i32_0 : i32, i32
  }
  func.func @transform_6(%arg0: i32) -> (i32, i32) {
    %c0_i32 = arith.constant 0 : i32
    %c0_i32_0 = arith.constant 0 : i32
    %c0_i32_1 = arith.constant 0 : i32
    return %c0_i32, %c0_i32_0 : i32, i32
  }
  func.func @transform_7(%arg0: i32) -> (i32, i32) {
    %c0_i32 = arith.constant 0 : i32
    %c0_i32_0 = arith.constant 0 : i32
    %c0_i32_1 = arith.constant 0 : i32
    return %c0_i32, %c0_i32_0 : i32, i32
  }
  func.func @transform_8(%arg0: i32) -> (i32, i32) {
    %c0_i32 = arith.constant 0 : i32
    %c0_i32_0 = arith.constant 0 : i32
    return %c0_i32, %arg0 : i32, i32
  }
}

</mosaic_0001>

<llo_original>
// kernel: tpu_custom_call.1
$region0: #{tpu_custom_call.1}
  #allocation0 [shape = 'u32[]', space=smem, size = 0x4, offset = 0x4, fixed_abs, tag = 'smem constant byte address 0x4 - core index']
  #allocation1 [shape = 'u32[72,128]{1,0:T(1,128)}', space=vmem, size = 0x9000, scoped, tag = 'internal scratch']
  %s0 = inlined_call_operand.vmem [shape: f32[8,256], index: 0, kind: input, shape index: {}]
  %s1 = inlined_call_operand.vmem [shape: f32[88,8], index: 1, kind: input, shape index: {}]
  %s2 = inlined_call_operand.vmem [shape: bf16[128,88], index: 2, kind: input, shape index: {}]
  %s3 = inlined_call_operand.vmem [shape: bf16[128,8], index: 3, kind: input, shape index: {}]
  %s4 = inlined_call_operand.vmem [shape: bf16[128,128], index: 4, kind: input, shape index: {}]
  %s5 = inlined_call_operand.vmem [shape: f32[128,1], index: 5, kind: input, shape index: {}]
  %s6 = inlined_call_operand.vmem [shape: bf16[3,128], index: 6, kind: input, shape index: {}]
  %s7 = inlined_call_operand.vmem [shape: f32[3,1], index: 7, kind: input, shape index: {}]
  %s8 = inlined_call_operand.hbm [shape: f32[3,256], index: 8, kind: output, shape index: {}]
  %s9 = sld [smem:[#allocation0]]
  $region65: #{tpu_custom_call.1} parent=0
    _
  %s11 = ssub.s32 1, %s9
  %s12 = scalar_select 0, %s11, %s9
  $region1: #{tpu_custom_call.1} parent=0
    #allocation2 [shape = 'u8[4096]{0}', space=vmem, size = 0x1000, scoped, tag = 'output window, operand 0']
    #allocation3 [shape = 's32[2]{0}', space=sflag, size = 0x8, scoped, tag = 'scoped memory for tpu_custom_call.1']
    %13 = vsyncpa [#allocation3], 0
    %s14 = scalar_lea.sflag [#allocation3], 1
    %15 = vsyncpa %s14, 0
    loop: start=0, step=1, limit=4
    $region2: #{tpu_custom_call.1} parent=1 // loop_pre_header
      _
    $region3: #{tpu_custom_call.1} parent=1 // loop_header
      %s17 = sphi 0, %s21
      %p18 = scmp.ge.s32.totalorder %s17, 4
      %s27 = sphi 0, %s29
      %s30 = sphi 0, %s27
      %s31 = sphi 0, %s30
      %s47 = sphi 0, %s31
      %s51 = sphi 0, %s51
      %s53 = sphi 0, %s51
      %s54 = sphi 0, %s53
      %s68 = sphi 0, %s54
      %s72 = sphi 0, %s72
      %s74 = sphi 0, %s72
      %s75 = sphi 0, %s74
      %s89 = sphi 0, %s75
      %s93 = sphi 0, %s93
      %s95 = sphi 0, %s93
      %s96 = sphi 0, %s95
      %s110 = sphi 0, %s96
      %s114 = sphi 0, %s114
      %s116 = sphi 0, %s114
      %s117 = sphi 0, %s116
      %s131 = sphi 0, %s117
      %s135 = sphi 0, %s135
      %s137 = sphi 0, %s135
      %s138 = sphi 0, %s137
      %s152 = sphi 0, %s138
      %s156 = sphi 0, %s156
      %s158 = sphi 0, %s156
      %s159 = sphi 0, %s158
      %s173 = sphi 0, %s159
      %s177 = sphi 0, %s177
      %s179 = sphi 0, %s177
      %s180 = sphi 0, %s179
      %s194 = sphi 0, %s180
      %s200 = sphi 0, %s202
      %s203 = sphi 0, %s200
      %s204 = sphi 0, %s203
      %s220 = sphi 0, %s204
    $region4: #{tpu_custom_call.1} parent=1 // loop_header_branch
      %20 = sbr.rel (%p18) target = $region8
    $region5: #{tpu_custom_call.1} parent=1 // loop_body
      %s22 = ssub.s32 %s17, 1
      %s23 = ssub.s32 %s17, 2
      %s24 = sadd.s32 %s17, 1
      %s25 = ssub.s32 %s17, %s24
      %p26 = scmp.eq.s32.totalorder %s25, 0
      %s28 = sadd.s32 %s27, 1
      %s29 = scalar_select %p26, %s27, %s28
      %p32 = pneg %p26
      %p33 = scmp.eq.s32.totalorder %s17, 1
      %p34 = por %p32, %p33
      %p35 = scmp.ne.s32.totalorder %s27, %s30
      %p36 = scmp.eq.s32.totalorder %s17, 0
      %p37 = por %p35, %p36
      %p38 = scmp.ne.s32.totalorder %s27, %s30
      %p39 = scmp.eq.s32.totalorder %s22, 1
      %p40 = por %p38, %p39
      %p41 = scmp.ne.s32.totalorder %s30, %s31
      %p42 = scmp.eq.s32.totalorder %s22, 0
      %p43 = por %p41, %p42
      %p44 = scmp.ne.s32.totalorder %s30, %s31
      %p45 = scmp.eq.s32.totalorder %s23, 1
      %p46 = por %p44, %p45
      %p48 = scmp.ne.s32.totalorder %s31, %s47
      %p49 = scmp.eq.s32.totalorder %s23, 0
      %p50 = por %p48, %p49
      %s52 = sadd.s32 %s51, 1
      %p55 = scmp.eq.s32.totalorder %s17, 1
      %p56 = scmp.ne.s32.totalorder %s51, %s53
      %p57 = scmp.eq.s32.totalorder %s17, 0
      %p58 = por %p56, %p57
      %p59 = scmp.ne.s32.totalorder %s51, %s53
      %p60 = scmp.eq.s32.totalorder %s22, 1
      %p61 = por %p59, %p60
      %p62 = scmp.ne.s32.totalorder %s53, %s54
      %p63 = scmp.eq.s32.totalorder %s22, 0
      %p64 = por %p62, %p63
      %p65 = scmp.ne.s32.totalorder %s53, %s54
      %p66 = scmp.eq.s32.totalorder %s23, 1
      %p67 = por %p65, %p66
      %p69 = scmp.ne.s32.totalorder %s54, %s68
      %p70 = scmp.eq.s32.totalorder %s23, 0
      %p71 = por %p69, %p70
      %s73 = sadd.s32 %s72, 1
      %p76 = scmp.eq.s32.totalorder %s17, 1
      %p77 = scmp.ne.s32.totalorder %s72, %s74
      %p78 = scmp.eq.s32.totalorder %s17, 0
      %p79 = por %p77, %p78
      %p80 = scmp.ne.s32.totalorder %s72, %s74
      %p81 = scmp.eq.s32.totalorder %s22, 1
      %p82 = por %p80, %p81
      %p83 = scmp.ne.s32.totalorder %s74, %s75
      %p84 = scmp.eq.s32.totalorder %s22, 0
      %p85 = por %p83, %p84
      %p86 = scmp.ne.s32.totalorder %s74, %s75
      %p87 = scmp.eq.s32.totalorder %s23, 1
      %p88 = por %p86, %p87
      %p90 = scmp.ne.s32.totalorder %s75, %s89
      %p91 = scmp.eq.s32.totalorder %s23, 0
      %p92 = por %p90, %p91
      %s94 = sadd.s32 %s93, 1
      %p97 = scmp.eq.s32.totalorder %s17, 1
      %p98 = scmp.ne.s32.totalorder %s93, %s95
      %p99 = scmp.eq.s32.totalorder %s17, 0
      %p100 = por %p98, %p99
      %p101 = scmp.ne.s32.totalorder %s93, %s95
      %p102 = scmp.eq.s32.totalorder %s22, 1
      %p103 = por %p101, %p102
      %p104 = scmp.ne.s32.totalorder %s95, %s96
      %p105 = scmp.eq.s32.totalorder %s22, 0
      %p106 = por %p104, %p105
      %p107 = scmp.ne.s32.totalorder %s95, %s96
      %p108 = scmp.eq.s32.totalorder %s23, 1
      %p109 = por %p107, %p108
      %p111 = scmp.ne.s32.totalorder %s96, %s110
      %p112 = scmp.eq.s32.totalorder %s23, 0
      %p113 = por %p111, %p112
      %s115 = sadd.s32 %s114, 1
      %p118 = scmp.eq.s32.totalorder %s17, 1
      %p119 = scmp.ne.s32.totalorder %s114, %s116
      %p120 = scmp.eq.s32.totalorder %s17, 0
      %p121 = por %p119, %p120
      %p122 = scmp.ne.s32.totalorder %s114, %s116
      %p123 = scmp.eq.s32.totalorder %s22, 1
      %p124 = por %p122, %p123
      %p125 = scmp.ne.s32.totalorder %s116, %s117
      %p126 = scmp.eq.s32.totalorder %s22, 0
      %p127 = por %p125, %p126
      %p128 = scmp.ne.s32.totalorder %s116, %s117
      %p129 = scmp.eq.s32.totalorder %s23, 1
      %p130 = por %p128, %p129
      %p132 = scmp.ne.s32.totalorder %s117, %s131
      %p133 = scmp.eq.s32.totalorder %s23, 0
      %p134 = por %p132, %p133
      %s136 = sadd.s32 %s135, 1
      %p139 = scmp.eq.s32.totalorder %s17, 1
      %p140 = scmp.ne.s32.totalorder %s135, %s137
      %p141 = scmp.eq.s32.totalorder %s17, 0
      %p142 = por %p140, %p141
      %p143 = scmp.ne.s32.totalorder %s135, %s137
      %p144 = scmp.eq.s32.totalorder %s22, 1
      %p145 = por %p143, %p144
      %p146 = scmp.ne.s32.totalorder %s137, %s138
      %p147 = scmp.eq.s32.totalorder %s22, 0
      %p148 = por %p146, %p147
      %p149 = scmp.ne.s32.totalorder %s137, %s138
      %p150 = scmp.eq.s32.totalorder %s23, 1
      %p151 = por %p149, %p150
      %p153 = scmp.ne.s32.totalorder %s138, %s152
      %p154 = scmp.eq.s32.totalorder %s23, 0
      %p155 = por %p153, %p154
      %s157 = sadd.s32 %s156, 1
      %p160 = scmp.eq.s32.totalorder %s17, 1
      %p161 = scmp.ne.s32.totalorder %s156, %s158
      %p162 = scmp.eq.s32.totalorder %s17, 0
      %p163 = por %p161, %p162
      %p164 = scmp.ne.s32.totalorder %s156, %s158
      %p165 = scmp.eq.s32.totalorder %s22, 1
      %p166 = por %p164, %p165
      %p167 = scmp.ne.s32.totalorder %s158, %s159
      %p168 = scmp.eq.s32.totalorder %s22, 0
      %p169 = por %p167, %p168
      %p170 = scmp.ne.s32.totalorder %s158, %s159
      %p171 = scmp.eq.s32.totalorder %s23, 1
      %p172 = por %p170, %p171
      %p174 = scmp.ne.s32.totalorder %s159, %s173
      %p175 = scmp.eq.s32.totalorder %s23, 0
      %p176 = por %p174, %p175
      %s178 = sadd.s32 %s177, 1
      %p181 = scmp.eq.s32.totalorder %s17, 1
      %p182 = scmp.ne.s32.totalorder %s177, %s179
      %p183 = scmp.eq.s32.totalorder %s17, 0
      %p184 = por %p182, %p183
      %p185 = scmp.ne.s32.totalorder %s177, %s179
      %p186 = scmp.eq.s32.totalorder %s22, 1
      %p187 = por %p185, %p186
      %p188 = scmp.ne.s32.totalorder %s179, %s180
      %p189 = scmp.eq.s32.totalorder %s22, 0
      %p190 = por %p188, %p189
      %p191 = scmp.ne.s32.totalorder %s179, %s180
      %p192 = scmp.eq.s32.totalorder %s23, 1
      %p193 = por %p191, %p192
      %p195 = scmp.ne.s32.totalorder %s180, %s194
      %p196 = scmp.eq.s32.totalorder %s23, 0
      %p197 = por %p195, %p196
      %s198 = ssub.s32 %s17, %s24
      %p199 = scmp.eq.s32.totalorder %s198, 0
      %s201 = sadd.s32 %s200, 1
      %s202 = scalar_select %p199, %s200, %s201
      %p205 = pneg %p199
      %p206 = scmp.eq.s32.totalorder %s17, 1
      %p207 = por %p205, %p206
      %p208 = scmp.ne.s32.totalorder %s200, %s203
      %p209 = scmp.eq.s32.totalorder %s17, 0
      %p210 = por %p208, %p209
      %p211 = scmp.ne.s32.totalorder %s200, %s203
      %p212 = scmp.eq.s32.totalorder %s22, 1
      %p213 = por %p211, %p212
      %p214 = scmp.ne.s32.totalorder %s203, %s204
      %p215 = scmp.eq.s32.totalorder %s22, 0
      %p216 = por %p214, %p215
      %p217 = scmp.ne.s32.totalorder %s203, %s204
      %p218 = scmp.eq.s32.totalorder %s23, 1
      %p219 = por %p217, %p218
      %p221 = scmp.ne.s32.totalorder %s204, %s220
      %p222 = scmp.eq.s32.totalorder %s23, 0
      %p223 = por %p221, %p222
      %p224 = scmp.le.s32.totalorder 1, %s17
      %p225 = scmp.lt.s32.totalorder %s17, 3
      %p226 = pnand %p224, %p225
      %p227 = pneg %p226
      // Predicated region
      $region9: #{tpu_custom_call.1} parent=5 // pred_check
        _
      $region10: #{tpu_custom_call.1} parent=5 // pred_check_branch
        %229 = sbr.rel (%p226) target = $region12
      $region11: #{tpu_custom_call.1} parent=5 // pred_region
        %s230 = ssub.s32 %s17, 1
        // Predicated region
        $region13: #{tpu_custom_call.1} parent=11 // pred_check
          %p231 = pneg %p64
        $region14: #{tpu_custom_call.1} parent=11 // pred_check_branch
          %233 = sbr.rel (%p231) target = $region16
        $region15: #{tpu_custom_call.1} parent=11 // pred_region
          _
        $region16: #{tpu_custom_call.1} parent=11 // pred_fallthru
          _
        // Predicated region
        $region17: #{tpu_custom_call.1} parent=11 // pred_check
          %p234 = pneg %p85
        $region18: #{tpu_custom_call.1} parent=11 // pred_check_branch
          %236 = sbr.rel (%p234) target = $region20
        $region19: #{tpu_custom_call.1} parent=11 // pred_region
          _
        $region20: #{tpu_custom_call.1} parent=11 // pred_fallthru
          _
        // Predicated region
        $region21: #{tpu_custom_call.1} parent=11 // pred_check
          %p237 = pneg %p106
        $region22: #{tpu_custom_call.1} parent=11 // pred_check_branch
          %239 = sbr.rel (%p237) target = $region24
        $region23: #{tpu_custom_call.1} parent=11 // pred_region
          _
        $region24: #{tpu_custom_call.1} parent=11 // pred_fallthru
          _
        // Predicated region
        $region25: #{tpu_custom_call.1} parent=11 // pred_check
          %p240 = pneg %p127
        $region26: #{tpu_custom_call.1} parent=11 // pred_check_branch
          %242 = sbr.rel (%p240) target = $region28
        $region27: #{tpu_custom_call.1} parent=11 // pred_region
          _
        $region28: #{tpu_custom_call.1} parent=11 // pred_fallthru
          _
        // Predicated region
        $region29: #{tpu_custom_call.1} parent=11 // pred_check
          %p243 = pneg %p148
        $region30: #{tpu_custom_call.1} parent=11 // pred_check_branch
          %245 = sbr.rel (%p243) target = $region32
        $region31: #{tpu_custom_call.1} parent=11 // pred_region
          _
        $region32: #{tpu_custom_call.1} parent=11 // pred_fallthru
          _
        // Predicated region
        $region33: #{tpu_custom_call.1} parent=11 // pred_check
          %p246 = pneg %p169
        $region34: #{tpu_custom_call.1} parent=11 // pred_check_branch
          %248 = sbr.rel (%p246) target = $region36
        $region35: #{tpu_custom_call.1} parent=11 // pred_region
          _
        $region36: #{tpu_custom_call.1} parent=11 // pred_fallthru
          _
        // Predicated region
        $region37: #{tpu_custom_call.1} parent=11 // pred_check
          %p249 = pneg %p190
        $region38: #{tpu_custom_call.1} parent=11 // pred_check_branch
          %251 = sbr.rel (%p249) target = $region40
        $region39: #{tpu_custom_call.1} parent=11 // pred_region
          _
        $region40: #{tpu_custom_call.1} parent=11 // pred_fallthru
          _
      $region12: #{tpu_custom_call.1} parent=5 // pred_fallthru
        _
      %p252 = scmp.lt.s32.totalorder %s17, 2
      // Predicated region
      $region41: #{tpu_custom_call.1} parent=5 // pred_check
        %p253 = pneg %p252
      $region42: #{tpu_custom_call.1} parent=5 // pred_check_branch
        %255 = sbr.rel (%p253) target = $region44
      $region43: #{tpu_custom_call.1} parent=5 // pred_region
        // Predicated region
        $region45: #{tpu_custom_call.1} parent=43 // pred_check
          %p256 = pneg %p37
        $region46: #{tpu_custom_call.1} parent=43 // pred_check_branch
          %258 = sbr.rel (%p256) target = $region48
        $region47: #{tpu_custom_call.1} parent=43 // pred_region
          %p259 = scmp.lt.s32.totalorder %s17, 1
          %s260 = scalar_select %p259, %s17, 1
          %s261 = smul.addr %s260, 8
          %s262 = scalar_lea.vmem %s0, %s261
        $region48: #{tpu_custom_call.1} parent=43 // pred_fallthru
          _
      $region44: #{tpu_custom_call.1} parent=5 // pred_fallthru
        _
      %p263 = scmp.le.s32.totalorder 1, %s17
      %p264 = scmp.lt.s32.totalorder %s17, 3
      %p265 = pnand %p263, %p264
      %p266 = pneg %p265
      // Predicated region
      $region49: #{tpu_custom_call.1} parent=5 // pred_check
        _
      $region50: #{tpu_custom_call.1} parent=5 // pred_check_branch
        %268 = sbr.rel (%p265) target = $region52
      $region51: #{tpu_custom_call.1} parent=5 // pred_region
        %s269 = ssub.s32 %s17, 1
        %p270 = scmp.lt.s32.totalorder %s22, 1
        %s271 = scalar_select %p270, %s22, 1
        %s272 = smul.addr %s271, 8
        %s273 = scalar_lea.vmem %s0, %s272
        %p274 = pneg %p43
        %p275 = pneg %p40
        %p276 = pneg %p64
        %p277 = pneg %p61
        %p278 = pneg %p85
        %p279 = pneg %p82
        %p280 = pneg %p106
        %p281 = pneg %p103
        %p282 = pneg %p127
        %p283 = pneg %p124
        %p284 = pneg %p148
        %p285 = pneg %p145
        %p286 = pneg %p169
        %p287 = pneg %p166
        %p288 = pneg %p190
        %p289 = pneg %p187
        %p290 = pneg %p216
        %p291 = pneg %p213
        %s292 = sand.u32 %s203, 1
        %s293 = scalar_lea.sflag [#allocation3], %s292
        %s294 = sand.u32 %s203, 1
        %s295 = smul.addr %s294, 4
        %s296 = scalar_lea.vmem [#allocation2], %s295
        %p297 = scmp.lt.s32.totalorder %s22, 1
        %s298 = scalar_select %p297, %s22, 1
        %s299 = smul.addr %s298, 8
        %s300 = scalar_lea.vmem %s0, %s299
        %v302 = vld [vmem:[%s300] sm:$0xff]
        %v303 = vld [vmem:[%s1] sm:$0xff]
        %v304 = vld [vmem:[%s1 + $0x8] sm:$0xff]
        %v305 = vld [vmem:[%s1 + $0x10] sm:$0xff]
        %v306 = vld [vmem:[%s1 + $0x18] sm:$0xff]
        %v307 = vld [vmem:[%s1 + $0x20] sm:$0xff]
        %v308 = vld [vmem:[%s1 + $0x28] sm:$0xff]
        %v309 = vld [vmem:[%s1 + $0x30] sm:$0xff]
        %v310 = vld [vmem:[%s1 + $0x38] sm:$0xff]
        %v311 = vld [vmem:[%s1 + $0x40] sm:$0xff]
        %v312 = vld [vmem:[%s1 + $0x48] sm:$0xff]
        %v313 = vld [vmem:[%s1 + $0x50] sm:$0xff]
        %vm314 = vcmask 64512
        %v316 = vsel %vm314, %v303, 0
        %v319 = vsel %vm314, %v304, 0
        %v322 = vsel %vm314, %v305, 0
        %v325 = vsel %vm314, %v306, 0
        %v328 = vsel %vm314, %v307, 0
        %v331 = vsel %vm314, %v308, 0
        %v334 = vsel %vm314, %v309, 0
        %v337 = vsel %vm314, %v310, 0
        %v340 = vsel %vm314, %v311, 0
        %v343 = vsel %vm314, %v312, 0
        %v346 = vsel %vm314, %v313, 0
        %348 = vmatpush.msra.mxu0 0.0
        %349 = vmatpush.msra.mxu0 0.0
        %350 = vmatpush.msra.mxu0 0.0
        %351 = vmatpush.msra.mxu0 0.0
        %352 = vmatpush.msra.mxu0 0.0
        %353 = vmatpush.msra.mxu0 0.0
        %354 = vmatpush.msra.mxu0 0.0
        %355 = vmatpush.msra.mxu0 0.0
        %356 = vmatpush.msra.mxu0 0.0
        %357 = vmatpush.msra.mxu0 0.0
        %358 = vmatpush.msra.mxu0 0.0
        %359 = vmatpush.msra.mxu0 0.0
        %360 = vmatpush.msra.mxu0 0.0
        %361 = vmatpush.msra.mxu0 0.0
        %362 = vmatpush.msra.mxu0 0.0
        %363 = vmatpush.msra.mxu0 %v302
        %364 = vmatmul.f32.gmra.mxu0 %v316
        %v365 = vpop.f32.mrf.mxu0
        %v366 = vadd.f32 0.0, %v365
        %367 = vmatmul.f32.gmra.mxu0 %v319
        %v368 = vpop.f32.mrf.mxu0
        %v369 = vadd.f32 0.0, %v368
        %370 = vmatmul.f32.gmra.mxu0 %v322
        %v371 = vpop.f32.mrf.mxu0
        %v372 = vadd.f32 0.0, %v371
        %373 = vmatmul.f32.gmra.mxu0 %v325
        %v374 = vpop.f32.mrf.mxu0
        %v375 = vadd.f32 0.0, %v374
        %376 = vmatmul.f32.gmra.mxu0 %v328
        %v377 = vpop.f32.mrf.mxu0
        %v378 = vadd.f32 0.0, %v377
        %379 = vmatmul.f32.gmra.mxu0 %v331
        %v380 = vpop.f32.mrf.mxu0
        %v381 = vadd.f32 0.0, %v380
        %382 = vmatmul.f32.gmra.mxu0 %v334
        %v383 = vpop.f32.mrf.mxu0
        %v384 = vadd.f32 0.0, %v383
        %385 = vmatmul.f32.gmra.mxu0 %v337
        %v386 = vpop.f32.mrf.mxu0
        %v387 = vadd.f32 0.0, %v386
        %388 = vmatmul.f32.gmra.mxu0 %v340
        %v389 = vpop.f32.mrf.mxu0
        %v390 = vadd.f32 0.0, %v389
        %391 = vmatmul.f32.gmra.mxu0 %v343
        %v392 = vpop.f32.mrf.mxu0
        %v393 = vadd.f32 0.0, %v392
        %394 = vmatmul.f32.gmra.mxu0 %v346
        %v395 = vpop.f32.mrf.mxu0
        %v396 = vadd.f32 0.0, %v395
        %397 = vdwg.mxu0
        %v398 = vand.u32 2147483647, %v366
        %vm399 = vcmp.le.f32.partialorder %v398, 0.7853982
        %vm400 = vcmp.lt.s32.totalorder %v366, 0
        %v401 = vand.u32 %v366, 2139095040
        %v402 = vshrl.u32 %v401, 23
        %v403 = vsub.s32 %v402, 127
        %v404 = vand.u32 2147483647, %v366
        %v405 = vand.u32 %v404, 8388607
        %v406 = vor.u32 %v405, 8388608
        %v407 = vsub.s32 0, %v406
        %v408 = vadd.s32 %v403, 1
        %vm409 = vcmp.gt.s32.totalorder %v408, 0
        %v410 = vsel %vm409, %v408, 0
        %v411 = vshrl.u32 %v410, 5
        %v412 = vand.u32 %v410, 31
        %v413 = vsub.s32 32, %v412
        %v414 = vshrl.u32 683565275, %v413
        %v415 = vshll.u32 683565275, %v412
        %v416 = vshrl.u32 2475754826, %v413
        %v417 = vor.u32 %v415, %v416
        %v418 = vshll.u32 2475754826, %v412
        %v419 = vshrl.u32 2131351028, %v413
        %v420 = vor.u32 %v418, %v419
        %v421 = vshll.u32 2131351028, %v412
        %v422 = vshrl.u32 2102212464, %v413
        %v423 = vor.u32 %v421, %v422
        %v424 = vshll.u32 2102212464, %v412
        %v425 = vshrl.u32 920167782, %v413
        %v426 = vor.u32 %v424, %v425
        %v427 = vshll.u32 920167782, %v412
        %v428 = vshrl.u32 1326507024, %v413
        %v429 = vor.u32 %v427, %v428
        %vm430 = vcmp.lt.s32.totalorder %v411, 1
        %vm431 = vcmp.lt.s32.totalorder %v411, 2
        %vm432 = vcmp.lt.s32.totalorder %v411, 3
        %vm433 = vcmp.lt.s32.totalorder %v411, 4
        %v434 = vsel %vm430, %v414, %v417
        %v435 = vsel %vm433, %v423, 2102212464
        %v436 = vsel %vm432, %v420, %v435
        %v437 = vsel %vm431, %v434, %v436
        %v438 = vsel %vm430, %v417, %v420
        %v439 = vsel %vm433, %v426, 920167782
        %v440 = vsel %vm432, %v423, %v439
        %v441 = vsel %vm431, %v438, %v440
        %v442 = vsel %vm430, %v420, %v423
        %v443 = vsel %vm433, %v429, 1326507024
        %v444 = vsel %vm432, %v426, %v443
        %v445 = vsel %vm431, %v442, %v444
        %v446 = vshll.u32 %v406, 8
        %v447 = vand.u32 %v446, 65535
        %v448 = vshrl.u32 %v446, 16
        %v449 = vand.u32 %v445, 65535
        %v450 = vshrl.u32 %v445, 16
        %v451 = vmul.u32 %v447, %v449
        %v452 = vmul.u32 %v447, %v450
        %v453 = vmul.u32 %v448, %v449
        %v454 = vmul.u32 %v448, %v450
        %v455 = vshll.u32 %v452, 16
        %v456 = vshrl.u32 %v452, 16
        %v457 = vshll.u32 %v453, 16
        %v458 = vshrl.u32 %v453, 16
        %vm459 = vc.u32 %v451, %v455
        %v460 = vsel %vm459, 1, 0
        %v461 = vadd.s32 %v451, %v455
        %v462 = vadd.s32 %v454, %v460
        %vm463 = vc.u32 %v461, %v457
        %v464 = vsel %vm463, 1, 0
        %v465 = vadd.s32 %v461, %v457
        %v466 = vadd.s32 %v462, %v464
        %v467 = vadd.s32 %v466, %v456
        %v468 = vadd.s32 %v467, %v458
        %v469 = vand.u32 %v446, 65535
        %v470 = vshrl.u32 %v446, 16
        %v471 = vand.u32 %v441, 65535
        %v472 = vshrl.u32 %v441, 16
        %v473 = vmul.u32 %v469, %v471
        %v474 = vmul.u32 %v469, %v472
        %v475 = vmul.u32 %v470, %v471
        %v476 = vmul.u32 %v470, %v472
        %v477 = vshll.u32 %v474, 16
        %v478 = vshrl.u32 %v474, 16
        %v479 = vshll.u32 %v475, 16
        %v480 = vshrl.u32 %v475, 16
        %vm481 = vc.u32 %v473, %v477
        %v482 = vsel %vm481, 1, 0
        %v483 = vadd.s32 %v473, %v477
        %v484 = vadd.s32 %v476, %v482
        %vm485 = vc.u32 %v483, %v479
        %v486 = vsel %vm485, 1, 0
        %v487 = vadd.s32 %v483, %v479
        %v488 = vadd.s32 %v484, %v486
        %v489 = vadd.s32 %v488, %v478
        %v490 = vadd.s32 %v489, %v480
        %v491 = vmul.u32 %v446, %v437
        %v492 = vadd.s32 %v468, %v487
        %vm493 = vc.u32 %v468, %v487
        %v494 = vadd.s32 %v490, 1
        %v495 = vsel %vm493, %v494, %v490
        %v496 = vadd.s32 %v491, %v495
        %v497 = vadd.s32 %v496, 536870912
        %v498 = vshrl.u32 %v497, 30
        %v499 = vshll.u32 %v498, 30
        %v500 = vsub.s32 %v496, %v499
        %vm501 = vcmp.lt.s32.totalorder %v500, 0
        %v502 = vsub.s32 0, %v500
        %v503 = vsel %vm501, %v502, %v500
        %v504 = vclz %v503
        %v505 = vsub.s32 %v504, 2
        %vm506 = vcmp.gt.s32.totalorder 0, %v505
        %v507 = vsel %vm506, 0, %v505
        %v508 = vsub.s32 32, %v507
        %v509 = vshll.u32 %v500, %v507
        %v510 = vshrl.u32 %v492, %v508
        %v511 = vor.u32 %v509, %v510
        %v512 = vsub.s32 4294967266, %v507
        %v513 = vadd.s32 %v512, 127
        %v514 = vshll.u32 %v513, 23
        %v515 = vor.u32 4788187, %v514
        %v516 = vand.u32 2147483647, %v515
        %v518 = vcvt.s32.f32 %v511
        %v519 = vmul.f32 %v518, %v516
        %v520 = vxor.u32 %v519, 2147483648
        %v521 = vsel %vm400, %v520, %v519
        %v522 = vsub.s32 4, %v498
        %v523 = vsel %vm400, %v522, %v498
        %v524 = vsel %vm399, %v366, %v521
        %v525 = vsel %vm399, 0, %v523
        %v526 = vmul.f32 %v524, %v524
        %v527 = vmul.f32 %v526, -0.001358992
        %v528 = vadd.f32 %v527, 0.041655596
        %v529 = vmul.f32 %v526, %v528
        %v530 = vadd.f32 %v529, -0.4999988
        %v531 = vmul.f32 %v526, %v530
        %v532 = vadd.f32 1.0, %v531
        %v533 = vmul.f32 %v524, %v524
        %v534 = vmul.f32 %v533, -0.00019511016
        %v535 = vadd.f32 %v534, 0.008332121
        %v536 = vmul.f32 %v533, %v535
        %v537 = vadd.f32 %v536, -0.16666654
        %v538 = vmul.f32 %v533, %v537
        %v539 = vadd.f32 %v538, 1.0
        %v540 = vmul.f32 %v539, %v524
        %vm541 = vweird.f32 %v366
        %v542 = vadd.s32 %v525, 3
        %v543 = vand.u32 %v542, 3
        %vm544 = vcmp.lt.s32.totalorder %v543, 2
        %vm545 = vcmp.eq.s32.totalorder %v543, 0
        %v546 = vxor.u32 %v540, 2147483648
        %v547 = vsel %vm545, %v532, %v546
        %vm548 = vcmp.eq.s32.totalorder %v543, 2
        %v549 = vxor.u32 %v532, 2147483648
        %v550 = vsel %vm548, %v549, %v540
        %v551 = vsel %vm544, %v547, %v550
        %v552 = vsel %vm541, nan, %v551
        %v553 = vand.u32 2147483647, %v369
        %vm554 = vcmp.le.f32.partialorder %v553, 0.7853982
        %vm555 = vcmp.lt.s32.totalorder %v369, 0
        %v556 = vand.u32 %v369, 2139095040
        %v557 = vshrl.u32 %v556, 23
        %v558 = vsub.s32 %v557, 127
        %v559 = vand.u32 2147483647, %v369
        %v560 = vand.u32 %v559, 8388607
        %v561 = vor.u32 %v560, 8388608
        %v562 = vsub.s32 0, %v561
        %v563 = vadd.s32 %v558, 1
        %vm564 = vcmp.gt.s32.totalorder %v563, 0
        %v565 = vsel %vm564, %v563, 0
        %v566 = vshrl.u32 %v565, 5
        %v567 = vand.u32 %v565, 31
        %v568 = vsub.s32 32, %v567
        %v569 = vshrl.u32 683565275, %v568
        %v570 = vshll.u32 683565275, %v567
        %v571 = vshrl.u32 2475754826, %v568
        %v572 = vor.u32 %v570, %v571
        %v573 = vshll.u32 2475754826, %v567
        %v574 = vshrl.u32 2131351028, %v568
        %v575 = vor.u32 %v573, %v574
        %v576 = vshll.u32 2131351028, %v567
        %v577 = vshrl.u32 2102212464, %v568
        %v578 = vor.u32 %v576, %v577
        %v579 = vshll.u32 2102212464, %v567
        %v580 = vshrl.u32 920167782, %v568
        %v581 = vor.u32 %v579, %v580
        %v582 = vshll.u32 920167782, %v567
        %v583 = vshrl.u32 1326507024, %v568
        %v584 = vor.u32 %v582, %v583
        %vm585 = vcmp.lt.s32.totalorder %v566, 1
        %vm586 = vcmp.lt.s32.totalorder %v566, 2
        %vm587 = vcmp.lt.s32.totalorder %v566, 3
        %vm588 = vcmp.lt.s32.totalorder %v566, 4
        %v589 = vsel %vm585, %v569, %v572
        %v590 = vsel %vm588, %v578, 2102212464
        %v591 = vsel %vm587, %v575, %v590
        %v592 = vsel %vm586, %v589, %v591
        %v593 = vsel %vm585, %v572, %v575
        %v594 = vsel %vm588, %v581, 920167782
        %v595 = vsel %vm587, %v578, %v594
        %v596 = vsel %vm586, %v593, %v595
        %v597 = vsel %vm585, %v575, %v578
        %v598 = vsel %vm588, %v584, 1326507024
        %v599 = vsel %vm587, %v581, %v598
        %v600 = vsel %vm586, %v597, %v599
        %v601 = vshll.u32 %v561, 8
        %v602 = vand.u32 %v601, 65535
        %v603 = vshrl.u32 %v601, 16
        %v604 = vand.u32 %v600, 65535
        %v605 = vshrl.u32 %v600, 16
        %v606 = vmul.u32 %v602, %v604
        %v607 = vmul.u32 %v602, %v605
        %v608 = vmul.u32 %v603, %v604
        %v609 = vmul.u32 %v603, %v605
        %v610 = vshll.u32 %v607, 16
        %v611 = vshrl.u32 %v607, 16
        %v612 = vshll.u32 %v608, 16
        %v613 = vshrl.u32 %v608, 16
        %vm614 = vc.u32 %v606, %v610
        %v615 = vsel %vm614, 1, 0
        %v616 = vadd.s32 %v606, %v610
        %v617 = vadd.s32 %v609, %v615
        %vm618 = vc.u32 %v616, %v612
        %v619 = vsel %vm618, 1, 0
        %v620 = vadd.s32 %v616, %v612
        %v621 = vadd.s32 %v617, %v619
        %v622 = vadd.s32 %v621, %v611
        %v623 = vadd.s32 %v622, %v613
        %v624 = vand.u32 %v601, 65535
        %v625 = vshrl.u32 %v601, 16
        %v626 = vand.u32 %v596, 65535
        %v627 = vshrl.u32 %v596, 16
        %v628 = vmul.u32 %v624, %v626
        %v629 = vmul.u32 %v624, %v627
        %v630 = vmul.u32 %v625, %v626
        %v631 = vmul.u32 %v625, %v627
        %v632 = vshll.u32 %v629, 16
        %v633 = vshrl.u32 %v629, 16
        %v634 = vshll.u32 %v630, 16
        %v635 = vshrl.u32 %v630, 16
        %vm636 = vc.u32 %v628, %v632
        %v637 = vsel %vm636, 1, 0
        %v638 = vadd.s32 %v628, %v632
        %v639 = vadd.s32 %v631, %v637
        %vm640 = vc.u32 %v638, %v634
        %v641 = vsel %vm640, 1, 0
        %v642 = vadd.s32 %v638, %v634
        %v643 = vadd.s32 %v639, %v641
        %v644 = vadd.s32 %v643, %v633
        %v645 = vadd.s32 %v644, %v635
        %v646 = vmul.u32 %v601, %v592
        %v647 = vadd.s32 %v623, %v642
        %vm648 = vc.u32 %v623, %v642
        %v649 = vadd.s32 %v645, 1
        %v650 = vsel %vm648, %v649, %v645
        %v651 = vadd.s32 %v646, %v650
        %v652 = vadd.s32 %v651, 536870912
        %v653 = vshrl.u32 %v652, 30
        %v654 = vshll.u32 %v653, 30
        %v655 = vsub.s32 %v651, %v654
        %vm656 = vcmp.lt.s32.totalorder %v655, 0
        %v657 = vsub.s32 0, %v655
        %v658 = vsel %vm656, %v657, %v655
        %v659 = vclz %v658
        %v660 = vsub.s32 %v659, 2
        %vm661 = vcmp.gt.s32.totalorder 0, %v660
        %v662 = vsel %vm661, 0, %v660
        %v663 = vsub.s32 32, %v662
        %v664 = vshll.u32 %v655, %v662
        %v665 = vshrl.u32 %v647, %v663
        %v666 = vor.u32 %v664, %v665
        %v667 = vsub.s32 4294967266, %v662
        %v668 = vadd.s32 %v667, 127
        %v669 = vshll.u32 %v668, 23
        %v670 = vor.u32 4788187, %v669
        %v671 = vand.u32 2147483647, %v670
        %v673 = vcvt.s32.f32 %v666
        %v674 = vmul.f32 %v673, %v671
        %v675 = vxor.u32 %v674, 2147483648
        %v676 = vsel %vm555, %v675, %v674
        %v677 = vsub.s32 4, %v653
        %v678 = vsel %vm555, %v677, %v653
        %v679 = vsel %vm554, %v369, %v676
        %v680 = vsel %vm554, 0, %v678
        %v681 = vmul.f32 %v679, %v679
        %v682 = vmul.f32 %v681, -0.001358992
        %v683 = vadd.f32 %v682, 0.041655596
        %v684 = vmul.f32 %v681, %v683
        %v685 = vadd.f32 %v684, -0.4999988
        %v686 = vmul.f32 %v681, %v685
        %v687 = vadd.f32 1.0, %v686
        %v688 = vmul.f32 %v679, %v679
        %v689 = vmul.f32 %v688, -0.00019511016
        %v690 = vadd.f32 %v689, 0.008332121
        %v691 = vmul.f32 %v688, %v690
        %v692 = vadd.f32 %v691, -0.16666654
        %v693 = vmul.f32 %v688, %v692
        %v694 = vadd.f32 %v693, 1.0
        %v695 = vmul.f32 %v694, %v679
        %vm696 = vweird.f32 %v369
        %v697 = vadd.s32 %v680, 3
        %v698 = vand.u32 %v697, 3
        %vm699 = vcmp.lt.s32.totalorder %v698, 2
        %vm700 = vcmp.eq.s32.totalorder %v698, 0
        %v701 = vxor.u32 %v695, 2147483648
        %v702 = vsel %vm700, %v687, %v701
        %vm703 = vcmp.eq.s32.totalorder %v698, 2
        %v704 = vxor.u32 %v687, 2147483648
        %v705 = vsel %vm703, %v704, %v695
        %v706 = vsel %vm699, %v702, %v705
        %v707 = vsel %vm696, nan, %v706
        %v708 = vand.u32 2147483647, %v372
        %vm709 = vcmp.le.f32.partialorder %v708, 0.7853982
        %vm710 = vcmp.lt.s32.totalorder %v372, 0
        %v711 = vand.u32 %v372, 2139095040
        %v712 = vshrl.u32 %v711, 23
        %v713 = vsub.s32 %v712, 127
        %v714 = vand.u32 2147483647, %v372
        %v715 = vand.u32 %v714, 8388607
        %v716 = vor.u32 %v715, 8388608
        %v717 = vsub.s32 0, %v716
        %v718 = vadd.s32 %v713, 1
        %vm719 = vcmp.gt.s32.totalorder %v718, 0
        %v720 = vsel %vm719, %v718, 0
        %v721 = vshrl.u32 %v720, 5
        %v722 = vand.u32 %v720, 31
        %v723 = vsub.s32 32, %v722
        %v724 = vshrl.u32 683565275, %v723
        %v725 = vshll.u32 683565275, %v722
        %v726 = vshrl.u32 2475754826, %v723
        %v727 = vor.u32 %v725, %v726
        %v728 = vshll.u32 2475754826, %v722
        %v729 = vshrl.u32 2131351028, %v723
        %v730 = vor.u32 %v728, %v729
        %v731 = vshll.u32 2131351028, %v722
        %v732 = vshrl.u32 2102212464, %v723
        %v733 = vor.u32 %v731, %v732
        %v734 = vshll.u32 2102212464, %v722
        %v735 = vshrl.u32 920167782, %v723
        %v736 = vor.u32 %v734, %v735
        %v737 = vshll.u32 920167782, %v722
        %v738 = vshrl.u32 1326507024, %v723
        %v739 = vor.u32 %v737, %v738
        %vm740 = vcmp.lt.s32.totalorder %v721, 1
        %vm741 = vcmp.lt.s32.totalorder %v721, 2
        %vm742 = vcmp.lt.s32.totalorder %v721, 3
        %vm743 = vcmp.lt.s32.totalorder %v721, 4
        %v744 = vsel %vm740, %v724, %v727
        %v745 = vsel %vm743, %v733, 2102212464
        %v746 = vsel %vm742, %v730, %v745
        %v747 = vsel %vm741, %v744, %v746
        %v748 = vsel %vm740, %v727, %v730
        %v749 = vsel %vm743, %v736, 920167782
        %v750 = vsel %vm742, %v733, %v749
        %v751 = vsel %vm741, %v748, %v750
        %v752 = vsel %vm740, %v730, %v733
        %v753 = vsel %vm743, %v739, 1326507024
        %v754 = vsel %vm742, %v736, %v753
        %v755 = vsel %vm741, %v752, %v754
        %v756 = vshll.u32 %v716, 8
        %v757 = vand.u32 %v756, 65535
        %v758 = vshrl.u32 %v756, 16
        %v759 = vand.u32 %v755, 65535
        %v760 = vshrl.u32 %v755, 16
        %v761 = vmul.u32 %v757, %v759
        %v762 = vmul.u32 %v757, %v760
        %v763 = vmul.u32 %v758, %v759
        %v764 = vmul.u32 %v758, %v760
        %v765 = vshll.u32 %v762, 16
        %v766 = vshrl.u32 %v762, 16
        %v767 = vshll.u32 %v763, 16
        %v768 = vshrl.u32 %v763, 16
        %vm769 = vc.u32 %v761, %v765
        %v770 = vsel %vm769, 1, 0
        %v771 = vadd.s32 %v761, %v765
        %v772 = vadd.s32 %v764, %v770
        %vm773 = vc.u32 %v771, %v767
        %v774 = vsel %vm773, 1, 0
        %v775 = vadd.s32 %v771, %v767
        %v776 = vadd.s32 %v772, %v774
        %v777 = vadd.s32 %v776, %v766
        %v778 = vadd.s32 %v777, %v768
        %v779 = vand.u32 %v756, 65535
        %v780 = vshrl.u32 %v756, 16
        %v781 = vand.u32 %v751, 65535
        %v782 = vshrl.u32 %v751, 16
        %v783 = vmul.u32 %v779, %v781
        %v784 = vmul.u32 %v779, %v782
        %v785 = vmul.u32 %v780, %v781
        %v786 = vmul.u32 %v780, %v782
        %v787 = vshll.u32 %v784, 16
        %v788 = vshrl.u32 %v784, 16
        %v789 = vshll.u32 %v785, 16
        %v790 = vshrl.u32 %v785, 16
        %vm791 = vc.u32 %v783, %v787
        %v792 = vsel %vm791, 1, 0
        %v793 = vadd.s32 %v783, %v787
        %v794 = vadd.s32 %v786, %v792
        %vm795 = vc.u32 %v793, %v789
        %v796 = vsel %vm795, 1, 0
        %v797 = vadd.s32 %v793, %v789
        %v798 = vadd.s32 %v794, %v796
        %v799 = vadd.s32 %v798, %v788
        %v800 = vadd.s32 %v799, %v790
        %v801 = vmul.u32 %v756, %v747
        %v802 = vadd.s32 %v778, %v797
        %vm803 = vc.u32 %v778, %v797
        %v804 = vadd.s32 %v800, 1
        %v805 = vsel %vm803, %v804, %v800
        %v806 = vadd.s32 %v801, %v805
        %v807 = vadd.s32 %v806, 536870912
        %v808 = vshrl.u32 %v807, 30
        %v809 = vshll.u32 %v808, 30
        %v810 = vsub.s32 %v806, %v809
        %vm811 = vcmp.lt.s32.totalorder %v810, 0
        %v812 = vsub.s32 0, %v810
        %v813 = vsel %vm811, %v812, %v810
        %v814 = vclz %v813
        %v815 = vsub.s32 %v814, 2
        %vm816 = vcmp.gt.s32.totalorder 0, %v815
        %v817 = vsel %vm816, 0, %v815
        %v818 = vsub.s32 32, %v817
        %v819 = vshll.u32 %v810, %v817
        %v820 = vshrl.u32 %v802, %v818
        %v821 = vor.u32 %v819, %v820
        %v822 = vsub.s32 4294967266, %v817
        %v823 = vadd.s32 %v822, 127
        %v824 = vshll.u32 %v823, 23
        %v825 = vor.u32 4788187, %v824
        %v826 = vand.u32 2147483647, %v825
        %v828 = vcvt.s32.f32 %v821
        %v829 = vmul.f32 %v828, %v826
        %v830 = vxor.u32 %v829, 2147483648
        %v831 = vsel %vm710, %v830, %v829
        %v832 = vsub.s32 4, %v808
        %v833 = vsel %vm710, %v832, %v808
        %v834 = vsel %vm709, %v372, %v831
        %v835 = vsel %vm709, 0, %v833
        %v836 = vmul.f32 %v834, %v834
        %v837 = vmul.f32 %v836, -0.001358992
        %v838 = vadd.f32 %v837, 0.041655596
        %v839 = vmul.f32 %v836, %v838
        %v840 = vadd.f32 %v839, -0.4999988
        %v841 = vmul.f32 %v836, %v840
        %v842 = vadd.f32 1.0, %v841
        %v843 = vmul.f32 %v834, %v834
        %v844 = vmul.f32 %v843, -0.00019511016
        %v845 = vadd.f32 %v844, 0.008332121
        %v846 = vmul.f32 %v843, %v845
        %v847 = vadd.f32 %v846, -0.16666654
        %v848 = vmul.f32 %v843, %v847
        %v849 = vadd.f32 %v848, 1.0
        %v850 = vmul.f32 %v849, %v834
        %vm851 = vweird.f32 %v372
        %v852 = vadd.s32 %v835, 3
        %v853 = vand.u32 %v852, 3
        %vm854 = vcmp.lt.s32.totalorder %v853, 2
        %vm855 = vcmp.eq.s32.totalorder %v853, 0
        %v856 = vxor.u32 %v850, 2147483648
        %v857 = vsel %vm855, %v842, %v856
        %vm858 = vcmp.eq.s32.totalorder %v853, 2
        %v859 = vxor.u32 %v842, 2147483648
        %v860 = vsel %vm858, %v859, %v850
        %v861 = vsel %vm854, %v857, %v860
        %v862 = vsel %vm851, nan, %v861
        %v863 = vand.u32 2147483647, %v375
        %vm864 = vcmp.le.f32.partialorder %v863, 0.7853982
        %vm865 = vcmp.lt.s32.totalorder %v375, 0
        %v866 = vand.u32 %v375, 2139095040
        %v867 = vshrl.u32 %v866, 23
        %v868 = vsub.s32 %v867, 127
        %v869 = vand.u32 2147483647, %v375
        %v870 = vand.u32 %v869, 8388607
        %v871 = vor.u32 %v870, 8388608
        %v872 = vsub.s32 0, %v871
        %v873 = vadd.s32 %v868, 1
        %vm874 = vcmp.gt.s32.totalorder %v873, 0
        %v875 = vsel %vm874, %v873, 0
        %v876 = vshrl.u32 %v875, 5
        %v877 = vand.u32 %v875, 31
        %v878 = vsub.s32 32, %v877
        %v879 = vshrl.u32 683565275, %v878
        %v880 = vshll.u32 683565275, %v877
        %v881 = vshrl.u32 2475754826, %v878
        %v882 = vor.u32 %v880, %v881
        %v883 = vshll.u32 2475754826, %v877
        %v884 = vshrl.u32 2131351028, %v878
        %v885 = vor.u32 %v883, %v884
        %v886 = vshll.u32 2131351028, %v877
        %v887 = vshrl.u32 2102212464, %v878
        %v888 = vor.u32 %v886, %v887
        %v889 = vshll.u32 2102212464, %v877
        %v890 = vshrl.u32 920167782, %v878
        %v891 = vor.u32 %v889, %v890
        %v892 = vshll.u32 920167782, %v877
        %v893 = vshrl.u32 1326507024, %v878
        %v894 = vor.u32 %v892, %v893
        %vm895 = vcmp.lt.s32.totalorder %v876, 1
        %vm896 = vcmp.lt.s32.totalorder %v876, 2
        %vm897 = vcmp.lt.s32.totalorder %v876, 3
        %vm898 = vcmp.lt.s32.totalorder %v876, 4
        %v899 = vsel %vm895, %v879, %v882
        %v900 = vsel %vm898, %v888, 2102212464
        %v901 = vsel %vm897, %v885, %v900
        %v902 = vsel %vm896, %v899, %v901
        %v903 = vsel %vm895, %v882, %v885
        %v904 = vsel %vm898, %v891, 920167782
        %v905 = vsel %vm897, %v888, %v904
        %v906 = vsel %vm896, %v903, %v905
        %v907 = vsel %vm895, %v885, %v888
        %v908 = vsel %vm898, %v894, 1326507024
        %v909 = vsel %vm897, %v891, %v908
        %v910 = vsel %vm896, %v907, %v909
        %v911 = vshll.u32 %v871, 8
        %v912 = vand.u32 %v911, 65535
        %v913 = vshrl.u32 %v911, 16
        %v914 = vand.u32 %v910, 65535
        %v915 = vshrl.u32 %v910, 16
        %v916 = vmul.u32 %v912, %v914
        %v917 = vmul.u32 %v912, %v915
        %v918 = vmul.u32 %v913, %v914
        %v919 = vmul.u32 %v913, %v915
        %v920 = vshll.u32 %v917, 16
        %v921 = vshrl.u32 %v917, 16
        %v922 = vshll.u32 %v918, 16
        %v923 = vshrl.u32 %v918, 16
        %vm924 = vc.u32 %v916, %v920
        %v925 = vsel %vm924, 1, 0
        %v926 = vadd.s32 %v916, %v920
        %v927 = vadd.s32 %v919, %v925
        %vm928 = vc.u32 %v926, %v922
        %v929 = vsel %vm928, 1, 0
        %v930 = vadd.s32 %v926, %v922
        %v931 = vadd.s32 %v927, %v929
        %v932 = vadd.s32 %v931, %v921
        %v933 = vadd.s32 %v932, %v923
        %v934 = vand.u32 %v911, 65535
        %v935 = vshrl.u32 %v911, 16
        %v936 = vand.u32 %v906, 65535
        %v937 = vshrl.u32 %v906, 16
        %v938 = vmul.u32 %v934, %v936
        %v939 = vmul.u32 %v934, %v937
        %v940 = vmul.u32 %v935, %v936
        %v941 = vmul.u32 %v935, %v937
        %v942 = vshll.u32 %v939, 16
        %v943 = vshrl.u32 %v939, 16
        %v944 = vshll.u32 %v940, 16
        %v945 = vshrl.u32 %v940, 16
        %vm946 = vc.u32 %v938, %v942
        %v947 = vsel %vm946, 1, 0
        %v948 = vadd.s32 %v938, %v942
        %v949 = vadd.s32 %v941, %v947
        %vm950 = vc.u32 %v948, %v944
        %v951 = vsel %vm950, 1, 0
        %v952 = vadd.s32 %v948, %v944
        %v953 = vadd.s32 %v949, %v951
        %v954 = vadd.s32 %v953, %v943
        %v955 = vadd.s32 %v954, %v945
        %v956 = vmul.u32 %v911, %v902
        %v957 = vadd.s32 %v933, %v952
        %vm958 = vc.u32 %v933, %v952
        %v959 = vadd.s32 %v955, 1
        %v960 = vsel %vm958, %v959, %v955
        %v961 = vadd.s32 %v956, %v960
        %v962 = vadd.s32 %v961, 536870912
        %v963 = vshrl.u32 %v962, 30
        %v964 = vshll.u32 %v963, 30
        %v965 = vsub.s32 %v961, %v964
        %vm966 = vcmp.lt.s32.totalorder %v965, 0
        %v967 = vsub.s32 0, %v965
        %v968 = vsel %vm966, %v967, %v965
        %v969 = vclz %v968
        %v970 = vsub.s32 %v969, 2
        %vm971 = vcmp.gt.s32.totalorder 0, %v970
        %v972 = vsel %vm971, 0, %v970
        %v973 = vsub.s32 32, %v972
        %v974 = vshll.u32 %v965, %v972
        %v975 = vshrl.u32 %v957, %v973
        %v976 = vor.u32 %v974, %v975
        %v977 = vsub.s32 4294967266, %v972
        %v978 = vadd.s32 %v977, 127
        %v979 = vshll.u32 %v978, 23
        %v980 = vor.u32 4788187, %v979
        %v981 = vand.u32 2147483647, %v980
        %v983 = vcvt.s32.f32 %v976
        %v984 = vmul.f32 %v983, %v981
        %v985 = vxor.u32 %v984, 2147483648
        %v986 = vsel %vm865, %v985, %v984
        %v987 = vsub.s32 4, %v963
        %v988 = vsel %vm865, %v987, %v963
        %v989 = vsel %vm864, %v375, %v986
        %v990 = vsel %vm864, 0, %v988
        %v991 = vmul.f32 %v989, %v989
        %v992 = vmul.f32 %v991, -0.001358992
        %v993 = vadd.f32 %v992, 0.041655596
        %v994 = vmul.f32 %v991, %v993
        %v995 = vadd.f32 %v994, -0.4999988
        %v996 = vmul.f32 %v991, %v995
        %v997 = vadd.f32 1.0, %v996
        %v998 = vmul.f32 %v989, %v989
        %v999 = vmul.f32 %v998, -0.00019511016
        %v1000 = vadd.f32 %v999, 0.008332121
        %v1001 = vmul.f32 %v998, %v1000
        %v1002 = vadd.f32 %v1001, -0.16666654
        %v1003 = vmul.f32 %v998, %v1002
        %v1004 = vadd.f32 %v1003, 1.0
        %v1005 = vmul.f32 %v1004, %v989
        %vm1006 = vweird.f32 %v375
        %v1007 = vadd.s32 %v990, 3
        %v1008 = vand.u32 %v1007, 3
        %vm1009 = vcmp.lt.s32.totalorder %v1008, 2
        %vm1010 = vcmp.eq.s32.totalorder %v1008, 0
        %v1011 = vxor.u32 %v1005, 2147483648
        %v1012 = vsel %vm1010, %v997, %v1011
        %vm1013 = vcmp.eq.s32.totalorder %v1008, 2
        %v1014 = vxor.u32 %v997, 2147483648
        %v1015 = vsel %vm1013, %v1014, %v1005
        %v1016 = vsel %vm1009, %v1012, %v1015
        %v1017 = vsel %vm1006, nan, %v1016
        %v1018 = vand.u32 2147483647, %v378
        %vm1019 = vcmp.le.f32.partialorder %v1018, 0.7853982
        %vm1020 = vcmp.lt.s32.totalorder %v378, 0
        %v1021 = vand.u32 %v378, 2139095040
        %v1022 = vshrl.u32 %v1021, 23
        %v1023 = vsub.s32 %v1022, 127
        %v1024 = vand.u32 2147483647, %v378
        %v1025 = vand.u32 %v1024, 8388607
        %v1026 = vor.u32 %v1025, 8388608
        %v1027 = vsub.s32 0, %v1026
        %v1028 = vadd.s32 %v1023, 1
        %vm1029 = vcmp.gt.s32.totalorder %v1028, 0
        %v1030 = vsel %vm1029, %v1028, 0
        %v1031 = vshrl.u32 %v1030, 5
        %v1032 = vand.u32 %v1030, 31
        %v1033 = vsub.s32 32, %v1032
        %v1034 = vshrl.u32 683565275, %v1033
        %v1035 = vshll.u32 683565275, %v1032
        %v1036 = vshrl.u32 2475754826, %v1033
        %v1037 = vor.u32 %v1035, %v1036
        %v1038 = vshll.u32 2475754826, %v1032
        %v1039 = vshrl.u32 2131351028, %v1033
        %v1040 = vor.u32 %v1038, %v1039
        %v1041 = vshll.u32 2131351028, %v1032
        %v1042 = vshrl.u32 2102212464, %v1033
        %v1043 = vor.u32 %v1041, %v1042
        %v1044 = vshll.u32 2102212464, %v1032
        %v1045 = vshrl.u32 920167782, %v1033
        %v1046 = vor.u32 %v1044, %v1045
        %v1047 = vshll.u32 920167782, %v1032
        %v1048 = vshrl.u32 1326507024, %v1033
        %v1049 = vor.u32 %v1047, %v1048
        %vm1050 = vcmp.lt.s32.totalorder %v1031, 1
        %vm1051 = vcmp.lt.s32.totalorder %v1031, 2
        %vm1052 = vcmp.lt.s32.totalorder %v1031, 3
        %vm1053 = vcmp.lt.s32.totalorder %v1031, 4
        %v1054 = vsel %vm1050, %v1034, %v1037
        %v1055 = vsel %vm1053, %v1043, 2102212464
        %v1056 = vsel %vm1052, %v1040, %v1055
        %v1057 = vsel %vm1051, %v1054, %v1056
        %v1058 = vsel %vm1050, %v1037, %v1040
        %v1059 = vsel %vm1053, %v1046, 920167782
        %v1060 = vsel %vm1052, %v1043, %v1059
        %v1061 = vsel %vm1051, %v1058, %v1060
        %v1062 = vsel %vm1050, %v1040, %v1043
        %v1063 = vsel %vm1053, %v1049, 1326507024
        %v1064 = vsel %vm1052, %v1046, %v1063
        %v1065 = vsel %vm1051, %v1062, %v1064
        %v1066 = vshll.u32 %v1026, 8
        %v1067 = vand.u32 %v1066, 65535
        %v1068 = vshrl.u32 %v1066, 16
        %v1069 = vand.u32 %v1065, 65535
        %v1070 = vshrl.u32 %v1065, 16
        %v1071 = vmul.u32 %v1067, %v1069
        %v1072 = vmul.u32 %v1067, %v1070
        %v1073 = vmul.u32 %v1068, %v1069
        %v1074 = vmul.u32 %v1068, %v1070
        %v1075 = vshll.u32 %v1072, 16
        %v1076 = vshrl.u32 %v1072, 16
        %v1077 = vshll.u32 %v1073, 16
        %v1078 = vshrl.u32 %v1073, 16
        %vm1079 = vc.u32 %v1071, %v1075
        %v1080 = vsel %vm1079, 1, 0
        %v1081 = vadd.s32 %v1071, %v1075
        %v1082 = vadd.s32 %v1074, %v1080
        %vm1083 = vc.u32 %v1081, %v1077
        %v1084 = vsel %vm1083, 1, 0
        %v1085 = vadd.s32 %v1081, %v1077
        %v1086 = vadd.s32 %v1082, %v1084
        %v1087 = vadd.s32 %v1086, %v1076
        %v1088 = vadd.s32 %v1087, %v1078
        %v1089 = vand.u32 %v1066, 65535
        %v1090 = vshrl.u32 %v1066, 16
        %v1091 = vand.u32 %v1061, 65535
        %v1092 = vshrl.u32 %v1061, 16
        %v1093 = vmul.u32 %v1089, %v1091
        %v1094 = vmul.u32 %v1089, %v1092
        %v1095 = vmul.u32 %v1090, %v1091
        %v1096 = vmul.u32 %v1090, %v1092
        %v1097 = vshll.u32 %v1094, 16
        %v1098 = vshrl.u32 %v1094, 16
        %v1099 = vshll.u32 %v1095, 16
        %v1100 = vshrl.u32 %v1095, 16
        %vm1101 = vc.u32 %v1093, %v1097
        %v1102 = vsel %vm1101, 1, 0
        %v1103 = vadd.s32 %v1093, %v1097
        %v1104 = vadd.s32 %v1096, %v1102
        %vm1105 = vc.u32 %v1103, %v1099
        %v1106 = vsel %vm1105, 1, 0
        %v1107 = vadd.s32 %v1103, %v1099
        %v1108 = vadd.s32 %v1104, %v1106
        %v1109 = vadd.s32 %v1108, %v1098
        %v1110 = vadd.s32 %v1109, %v1100
        %v1111 = vmul.u32 %v1066, %v1057
        %v1112 = vadd.s32 %v1088, %v1107
        %vm1113 = vc.u32 %v1088, %v1107
        %v1114 = vadd.s32 %v1110, 1
        %v1115 = vsel %vm1113, %v1114, %v1110
        %v1116 = vadd.s32 %v1111, %v1115
        %v1117 = vadd.s32 %v1116, 536870912
        %v1118 = vshrl.u32 %v1117, 30
        %v1119 = vshll.u32 %v1118, 30
        %v1120 = vsub.s32 %v1116, %v1119
        %vm1121 = vcmp.lt.s32.totalorder %v1120, 0
        %v1122 = vsub.s32 0, %v1120
        %v1123 = vsel %vm1121, %v1122, %v1120
        %v1124 = vclz %v1123
        %v1125 = vsub.s32 %v1124, 2
        %vm1126 = vcmp.gt.s32.totalorder 0, %v1125
        %v1127 = vsel %vm1126, 0, %v1125
        %v1128 = vsub.s32 32, %v1127
        %v1129 = vshll.u32 %v1120, %v1127
        %v1130 = vshrl.u32 %v1112, %v1128
        %v1131 = vor.u32 %v1129, %v1130
        %v1132 = vsub.s32 4294967266, %v1127
        %v1133 = vadd.s32 %v1132, 127
        %v1134 = vshll.u32 %v1133, 23
        %v1135 = vor.u32 4788187, %v1134
        %v1136 = vand.u32 2147483647, %v1135
        %v1138 = vcvt.s32.f32 %v1131
        %v1139 = vmul.f32 %v1138, %v1136
        %v1140 = vxor.u32 %v1139, 2147483648
        %v1141 = vsel %vm1020, %v1140, %v1139
        %v1142 = vsub.s32 4, %v1118
        %v1143 = vsel %vm1020, %v1142, %v1118
        %v1144 = vsel %vm1019, %v378, %v1141
        %v1145 = vsel %vm1019, 0, %v1143
        %v1146 = vmul.f32 %v1144, %v1144
        %v1147 = vmul.f32 %v1146, -0.001358992
        %v1148 = vadd.f32 %v1147, 0.041655596
        %v1149 = vmul.f32 %v1146, %v1148
        %v1150 = vadd.f32 %v1149, -0.4999988
        %v1151 = vmul.f32 %v1146, %v1150
        %v1152 = vadd.f32 1.0, %v1151
        %v1153 = vmul.f32 %v1144, %v1144
        %v1154 = vmul.f32 %v1153, -0.00019511016
        %v1155 = vadd.f32 %v1154, 0.008332121
        %v1156 = vmul.f32 %v1153, %v1155
        %v1157 = vadd.f32 %v1156, -0.16666654
        %v1158 = vmul.f32 %v1153, %v1157
        %v1159 = vadd.f32 %v1158, 1.0
        %v1160 = vmul.f32 %v1159, %v1144
        %vm1161 = vweird.f32 %v378
        %v1162 = vadd.s32 %v1145, 3
        %v1163 = vand.u32 %v1162, 3
        %vm1164 = vcmp.lt.s32.totalorder %v1163, 2
        %vm1165 = vcmp.eq.s32.totalorder %v1163, 0
        %v1166 = vxor.u32 %v1160, 2147483648
        %v1167 = vsel %vm1165, %v1152, %v1166
        %vm1168 = vcmp.eq.s32.totalorder %v1163, 2
        %v1169 = vxor.u32 %v1152, 2147483648
        %v1170 = vsel %vm1168, %v1169, %v1160
        %v1171 = vsel %vm1164, %v1167, %v1170
        %v1172 = vsel %vm1161, nan, %v1171
        %v1173 = vand.u32 2147483647, %v381
        %vm1174 = vcmp.le.f32.partialorder %v1173, 0.7853982
        %vm1175 = vcmp.lt.s32.totalorder %v381, 0
        %v1176 = vand.u32 %v381, 2139095040
        %v1177 = vshrl.u32 %v1176, 23
        %v1178 = vsub.s32 %v1177, 127
        %v1179 = vand.u32 2147483647, %v381
        %v1180 = vand.u32 %v1179, 8388607
        %v1181 = vor.u32 %v1180, 8388608
        %v1182 = vsub.s32 0, %v1181
        %v1183 = vadd.s32 %v1178, 1
        %vm1184 = vcmp.gt.s32.totalorder %v1183, 0
        %v1185 = vsel %vm1184, %v1183, 0
        %v1186 = vshrl.u32 %v1185, 5
        %v1187 = vand.u32 %v1185, 31
        %v1188 = vsub.s32 32, %v1187
        %v1189 = vshrl.u32 683565275, %v1188
        %v1190 = vshll.u32 683565275, %v1187
        %v1191 = vshrl.u32 2475754826, %v1188
        %v1192 = vor.u32 %v1190, %v1191
        %v1193 = vshll.u32 2475754826, %v1187
        %v1194 = vshrl.u32 2131351028, %v1188
        %v1195 = vor.u32 %v1193, %v1194
        %v1196 = vshll.u32 2131351028, %v1187
        %v1197 = vshrl.u32 2102212464, %v1188
        %v1198 = vor.u32 %v1196, %v1197
        %v1199 = vshll.u32 2102212464, %v1187
        %v1200 = vshrl.u32 920167782, %v1188
        %v1201 = vor.u32 %v1199, %v1200
        %v1202 = vshll.u32 920167782, %v1187
        %v1203 = vshrl.u32 1326507024, %v1188
        %v1204 = vor.u32 %v1202, %v1203
        %vm1205 = vcmp.lt.s32.totalorder %v1186, 1
        %vm1206 = vcmp.lt.s32.totalorder %v1186, 2
        %vm1207 = vcmp.lt.s32.totalorder %v1186, 3
        %vm1208 = vcmp.lt.s32.totalorder %v1186, 4
        %v1209 = vsel %vm1205, %v1189, %v1192
        %v1210 = vsel %vm1208, %v1198, 2102212464
        %v1211 = vsel %vm1207, %v1195, %v1210
        %v1212 = vsel %vm1206, %v1209, %v1211
        %v1213 = vsel %vm1205, %v1192, %v1195
        %v1214 = vsel %vm1208, %v1201, 920167782
        %v1215 = vsel %vm1207, %v1198, %v1214
        %v1216 = vsel %vm1206, %v1213, %v1215
        %v1217 = vsel %vm1205, %v1195, %v1198
        %v1218 = vsel %vm1208, %v1204, 1326507024
        %v1219 = vsel %vm1207, %v1201, %v1218
        %v1220 = vsel %vm1206, %v1217, %v1219
        %v1221 = vshll.u32 %v1181, 8
        %v1222 = vand.u32 %v1221, 65535
        %v1223 = vshrl.u32 %v1221, 16
        %v1224 = vand.u32 %v1220, 65535
        %v1225 = vshrl.u32 %v1220, 16
        %v1226 = vmul.u32 %v1222, %v1224
        %v1227 = vmul.u32 %v1222, %v1225
        %v1228 = vmul.u32 %v1223, %v1224
        %v1229 = vmul.u32 %v1223, %v1225
        %v1230 = vshll.u32 %v1227, 16
        %v1231 = vshrl.u32 %v1227, 16
        %v1232 = vshll.u32 %v1228, 16
        %v1233 = vshrl.u32 %v1228, 16
        %vm1234 = vc.u32 %v1226, %v1230
        %v1235 = vsel %vm1234, 1, 0
        %v1236 = vadd.s32 %v1226, %v1230
        %v1237 = vadd.s32 %v1229, %v1235
        %vm1238 = vc.u32 %v1236, %v1232
        %v1239 = vsel %vm1238, 1, 0
        %v1240 = vadd.s32 %v1236, %v1232
        %v1241 = vadd.s32 %v1237, %v1239
        %v1242 = vadd.s32 %v1241, %v1231
        %v1243 = vadd.s32 %v1242, %v1233
        %v1244 = vand.u32 %v1221, 65535
        %v1245 = vshrl.u32 %v1221, 16
        %v1246 = vand.u32 %v1216, 65535
        %v1247 = vshrl.u32 %v1216, 16
        %v1248 = vmul.u32 %v1244, %v1246
        %v1249 = vmul.u32 %v1244, %v1247
        %v1250 = vmul.u32 %v1245, %v1246
        %v1251 = vmul.u32 %v1245, %v1247
        %v1252 = vshll.u32 %v1249, 16
        %v1253 = vshrl.u32 %v1249, 16
        %v1254 = vshll.u32 %v1250, 16
        %v1255 = vshrl.u32 %v1250, 16
        %vm1256 = vc.u32 %v1248, %v1252
        %v1257 = vsel %vm1256, 1, 0
        %v1258 = vadd.s32 %v1248, %v1252
        %v1259 = vadd.s32 %v1251, %v1257
        %vm1260 = vc.u32 %v1258, %v1254
        %v1261 = vsel %vm1260, 1, 0
        %v1262 = vadd.s32 %v1258, %v1254
        %v1263 = vadd.s32 %v1259, %v1261
        %v1264 = vadd.s32 %v1263, %v1253
        %v1265 = vadd.s32 %v1264, %v1255
        %v1266 = vmul.u32 %v1221, %v1212
        %v1267 = vadd.s32 %v1243, %v1262
        %vm1268 = vc.u32 %v1243, %v1262
        %v1269 = vadd.s32 %v1265, 1
        %v1270 = vsel %vm1268, %v1269, %v1265
        %v1271 = vadd.s32 %v1266, %v1270
        %v1272 = vadd.s32 %v1271, 536870912
        %v1273 = vshrl.u32 %v1272, 30
        %v1274 = vshll.u32 %v1273, 30
        %v1275 = vsub.s32 %v1271, %v1274
        %vm1276 = vcmp.lt.s32.totalorder %v1275, 0
        %v1277 = vsub.s32 0, %v1275
        %v1278 = vsel %vm1276, %v1277, %v1275
        %v1279 = vclz %v1278
        %v1280 = vsub.s32 %v1279, 2
        %vm1281 = vcmp.gt.s32.totalorder 0, %v1280
        %v1282 = vsel %vm1281, 0, %v1280
        %v1283 = vsub.s32 32, %v1282
        %v1284 = vshll.u32 %v1275, %v1282
        %v1285 = vshrl.u32 %v1267, %v1283
        %v1286 = vor.u32 %v1284, %v1285
        %v1287 = vsub.s32 4294967266, %v1282
        %v1288 = vadd.s32 %v1287, 127
        %v1289 = vshll.u32 %v1288, 23
        %v1290 = vor.u32 4788187, %v1289
        %v1291 = vand.u32 2147483647, %v1290
        %v1293 = vcvt.s32.f32 %v1286
        %v1294 = vmul.f32 %v1293, %v1291
        %v1295 = vxor.u32 %v1294, 2147483648
        %v1296 = vsel %vm1175, %v1295, %v1294
        %v1297 = vsub.s32 4, %v1273
        %v1298 = vsel %vm1175, %v1297, %v1273
        %v1299 = vsel %vm1174, %v381, %v1296
        %v1300 = vsel %vm1174, 0, %v1298
        %v1301 = vmul.f32 %v1299, %v1299
        %v1302 = vmul.f32 %v1301, -0.001358992
        %v1303 = vadd.f32 %v1302, 0.041655596
        %v1304 = vmul.f32 %v1301, %v1303
        %v1305 = vadd.f32 %v1304, -0.4999988
        %v1306 = vmul.f32 %v1301, %v1305
        %v1307 = vadd.f32 1.0, %v1306
        %v1308 = vmul.f32 %v1299, %v1299
        %v1309 = vmul.f32 %v1308, -0.00019511016
        %v1310 = vadd.f32 %v1309, 0.008332121
        %v1311 = vmul.f32 %v1308, %v1310
        %v1312 = vadd.f32 %v1311, -0.16666654
        %v1313 = vmul.f32 %v1308, %v1312
        %v1314 = vadd.f32 %v1313, 1.0
        %v1315 = vmul.f32 %v1314, %v1299
        %vm1316 = vweird.f32 %v381
        %v1317 = vadd.s32 %v1300, 3
        %v1318 = vand.u32 %v1317, 3
        %vm1319 = vcmp.lt.s32.totalorder %v1318, 2
        %vm1320 = vcmp.eq.s32.totalorder %v1318, 0
        %v1321 = vxor.u32 %v1315, 2147483648
        %v1322 = vsel %vm1320, %v1307, %v1321
        %vm1323 = vcmp.eq.s32.totalorder %v1318, 2
        %v1324 = vxor.u32 %v1307, 2147483648
        %v1325 = vsel %vm1323, %v1324, %v1315
        %v1326 = vsel %vm1319, %v1322, %v1325
        %v1327 = vsel %vm1316, nan, %v1326
        %v1328 = vand.u32 2147483647, %v384
        %vm1329 = vcmp.le.f32.partialorder %v1328, 0.7853982
        %vm1330 = vcmp.lt.s32.totalorder %v384, 0
        %v1331 = vand.u32 %v384, 2139095040
        %v1332 = vshrl.u32 %v1331, 23
        %v1333 = vsub.s32 %v1332, 127
        %v1334 = vand.u32 2147483647, %v384
        %v1335 = vand.u32 %v1334, 8388607
        %v1336 = vor.u32 %v1335, 8388608
        %v1337 = vsub.s32 0, %v1336
        %v1338 = vadd.s32 %v1333, 1
        %vm1339 = vcmp.gt.s32.totalorder %v1338, 0
        %v1340 = vsel %vm1339, %v1338, 0
        %v1341 = vshrl.u32 %v1340, 5
        %v1342 = vand.u32 %v1340, 31
        %v1343 = vsub.s32 32, %v1342
        %v1344 = vshrl.u32 683565275, %v1343
        %v1345 = vshll.u32 683565275, %v1342
        %v1346 = vshrl.u32 2475754826, %v1343
        %v1347 = vor.u32 %v1345, %v1346
        %v1348 = vshll.u32 2475754826, %v1342
        %v1349 = vshrl.u32 2131351028, %v1343
        %v1350 = vor.u32 %v1348, %v1349
        %v1351 = vshll.u32 2131351028, %v1342
        %v1352 = vshrl.u32 2102212464, %v1343
        %v1353 = vor.u32 %v1351, %v1352
        %v1354 = vshll.u32 2102212464, %v1342
        %v1355 = vshrl.u32 920167782, %v1343
        %v1356 = vor.u32 %v1354, %v1355
        %v1357 = vshll.u32 920167782, %v1342
        %v1358 = vshrl.u32 1326507024, %v1343
        %v1359 = vor.u32 %v1357, %v1358
        %vm1360 = vcmp.lt.s32.totalorder %v1341, 1
        %vm1361 = vcmp.lt.s32.totalorder %v1341, 2
        %vm1362 = vcmp.lt.s32.totalorder %v1341, 3
        %vm1363 = vcmp.lt.s32.totalorder %v1341, 4
        %v1364 = vsel %vm1360, %v1344, %v1347
        %v1365 = vsel %vm1363, %v1353, 2102212464
        %v1366 = vsel %vm1362, %v1350, %v1365
        %v1367 = vsel %vm1361, %v1364, %v1366
        %v1368 = vsel %vm1360, %v1347, %v1350
        %v1369 = vsel %vm1363, %v1356, 920167782
        %v1370 = vsel %vm1362, %v1353, %v1369
        %v1371 = vsel %vm1361, %v1368, %v1370
        %v1372 = vsel %vm1360, %v1350, %v1353
        %v1373 = vsel %vm1363, %v1359, 1326507024
        %v1374 = vsel %vm1362, %v1356, %v1373
        %v1375 = vsel %vm1361, %v1372, %v1374
        %v1376 = vshll.u32 %v1336, 8
        %v1377 = vand.u32 %v1376, 65535
        %v1378 = vshrl.u32 %v1376, 16
        %v1379 = vand.u32 %v1375, 65535
        %v1380 = vshrl.u32 %v1375, 16
        %v1381 = vmul.u32 %v1377, %v1379
        %v1382 = vmul.u32 %v1377, %v1380
        %v1383 = vmul.u32 %v1378, %v1379
        %v1384 = vmul.u32 %v1378, %v1380
        %v1385 = vshll.u32 %v1382, 16
        %v1386 = vshrl.u32 %v1382, 16
        %v1387 = vshll.u32 %v1383, 16
        %v1388 = vshrl.u32 %v1383, 16
        %vm1389 = vc.u32 %v1381, %v1385
        %v1390 = vsel %vm1389, 1, 0
        %v1391 = vadd.s32 %v1381, %v1385
        %v1392 = vadd.s32 %v1384, %v1390
        %vm1393 = vc.u32 %v1391, %v1387
        %v1394 = vsel %vm1393, 1, 0
        %v1395 = vadd.s32 %v1391, %v1387
        %v1396 = vadd.s32 %v1392, %v1394
        %v1397 = vadd.s32 %v1396, %v1386
        %v1398 = vadd.s32 %v1397, %v1388
        %v1399 = vand.u32 %v1376, 65535
        %v1400 = vshrl.u32 %v1376, 16
        %v1401 = vand.u32 %v1371, 65535
        %v1402 = vshrl.u32 %v1371, 16
        %v1403 = vmul.u32 %v1399, %v1401
        %v1404 = vmul.u32 %v1399, %v1402
        %v1405 = vmul.u32 %v1400, %v1401
        %v1406 = vmul.u32 %v1400, %v1402
        %v1407 = vshll.u32 %v1404, 16
        %v1408 = vshrl.u32 %v1404, 16
        %v1409 = vshll.u32 %v1405, 16
        %v1410 = vshrl.u32 %v1405, 16
        %vm1411 = vc.u32 %v1403, %v1407
        %v1412 = vsel %vm1411, 1, 0
        %v1413 = vadd.s32 %v1403, %v1407
        %v1414 = vadd.s32 %v1406, %v1412
        %vm1415 = vc.u32 %v1413, %v1409
        %v1416 = vsel %vm1415, 1, 0
        %v1417 = vadd.s32 %v1413, %v1409
        %v1418 = vadd.s32 %v1414, %v1416
        %v1419 = vadd.s32 %v1418, %v1408
        %v1420 = vadd.s32 %v1419, %v1410
        %v1421 = vmul.u32 %v1376, %v1367
        %v1422 = vadd.s32 %v1398, %v1417
        %vm1423 = vc.u32 %v1398, %v1417
        %v1424 = vadd.s32 %v1420, 1
        %v1425 = vsel %vm1423, %v1424, %v1420
        %v1426 = vadd.s32 %v1421, %v1425
        %v1427 = vadd.s32 %v1426, 536870912
        %v1428 = vshrl.u32 %v1427, 30
        %v1429 = vshll.u32 %v1428, 30
        %v1430 = vsub.s32 %v1426, %v1429
        %vm1431 = vcmp.lt.s32.totalorder %v1430, 0
        %v1432 = vsub.s32 0, %v1430
        %v1433 = vsel %vm1431, %v1432, %v1430
        %v1434 = vclz %v1433
        %v1435 = vsub.s32 %v1434, 2
        %vm1436 = vcmp.gt.s32.totalorder 0, %v1435
        %v1437 = vsel %vm1436, 0, %v1435
        %v1438 = vsub.s32 32, %v1437
        %v1439 = vshll.u32 %v1430, %v1437
        %v1440 = vshrl.u32 %v1422, %v1438
        %v1441 = vor.u32 %v1439, %v1440
        %v1442 = vsub.s32 4294967266, %v1437
        %v1443 = vadd.s32 %v1442, 127
        %v1444 = vshll.u32 %v1443, 23
        %v1445 = vor.u32 4788187, %v1444
        %v1446 = vand.u32 2147483647, %v1445
        %v1448 = vcvt.s32.f32 %v1441
        %v1449 = vmul.f32 %v1448, %v1446
        %v1450 = vxor.u32 %v1449, 2147483648
        %v1451 = vsel %vm1330, %v1450, %v1449
        %v1452 = vsub.s32 4, %v1428
        %v1453 = vsel %vm1330, %v1452, %v1428
        %v1454 = vsel %vm1329, %v384, %v1451
        %v1455 = vsel %vm1329, 0, %v1453
        %v1456 = vmul.f32 %v1454, %v1454
        %v1457 = vmul.f32 %v1456, -0.001358992
        %v1458 = vadd.f32 %v1457, 0.041655596
        %v1459 = vmul.f32 %v1456, %v1458
        %v1460 = vadd.f32 %v1459, -0.4999988
        %v1461 = vmul.f32 %v1456, %v1460
        %v1462 = vadd.f32 1.0, %v1461
        %v1463 = vmul.f32 %v1454, %v1454
        %v1464 = vmul.f32 %v1463, -0.00019511016
        %v1465 = vadd.f32 %v1464, 0.008332121
        %v1466 = vmul.f32 %v1463, %v1465
        %v1467 = vadd.f32 %v1466, -0.16666654
        %v1468 = vmul.f32 %v1463, %v1467
        %v1469 = vadd.f32 %v1468, 1.0
        %v1470 = vmul.f32 %v1469, %v1454
        %vm1471 = vweird.f32 %v384
        %v1472 = vadd.s32 %v1455, 3
        %v1473 = vand.u32 %v1472, 3
        %vm1474 = vcmp.lt.s32.totalorder %v1473, 2
        %vm1475 = vcmp.eq.s32.totalorder %v1473, 0
        %v1476 = vxor.u32 %v1470, 2147483648
        %v1477 = vsel %vm1475, %v1462, %v1476
        %vm1478 = vcmp.eq.s32.totalorder %v1473, 2
        %v1479 = vxor.u32 %v1462, 2147483648
        %v1480 = vsel %vm1478, %v1479, %v1470
        %v1481 = vsel %vm1474, %v1477, %v1480
        %v1482 = vsel %vm1471, nan, %v1481
        %v1483 = vand.u32 2147483647, %v387
        %vm1484 = vcmp.le.f32.partialorder %v1483, 0.7853982
        %vm1485 = vcmp.lt.s32.totalorder %v387, 0
        %v1486 = vand.u32 %v387, 2139095040
        %v1487 = vshrl.u32 %v1486, 23
        %v1488 = vsub.s32 %v1487, 127
        %v1489 = vand.u32 2147483647, %v387
        %v1490 = vand.u32 %v1489, 8388607
        %v1491 = vor.u32 %v1490, 8388608
        %v1492 = vsub.s32 0, %v1491
        %v1493 = vadd.s32 %v1488, 1
        %vm1494 = vcmp.gt.s32.totalorder %v1493, 0
        %v1495 = vsel %vm1494, %v1493, 0
        %v1496 = vshrl.u32 %v1495, 5
        %v1497 = vand.u32 %v1495, 31
        %v1498 = vsub.s32 32, %v1497
        %v1499 = vshrl.u32 683565275, %v1498
        %v1500 = vshll.u32 683565275, %v1497
        %v1501 = vshrl.u32 2475754826, %v1498
        %v1502 = vor.u32 %v1500, %v1501
        %v1503 = vshll.u32 2475754826, %v1497
        %v1504 = vshrl.u32 2131351028, %v1498
        %v1505 = vor.u32 %v1503, %v1504
        %v1506 = vshll.u32 2131351028, %v1497
        %v1507 = vshrl.u32 2102212464, %v1498
        %v1508 = vor.u32 %v1506, %v1507
        %v1509 = vshll.u32 2102212464, %v1497
        %v1510 = vshrl.u32 920167782, %v1498
        %v1511 = vor.u32 %v1509, %v1510
        %v1512 = vshll.u32 920167782, %v1497
        %v1513 = vshrl.u32 1326507024, %v1498
        %v1514 = vor.u32 %v1512, %v1513
        %vm1515 = vcmp.lt.s32.totalorder %v1496, 1
        %vm1516 = vcmp.lt.s32.totalorder %v1496, 2
        %vm1517 = vcmp.lt.s32.totalorder %v1496, 3
        %vm1518 = vcmp.lt.s32.totalorder %v1496, 4
        %v1519 = vsel %vm1515, %v1499, %v1502
        %v1520 = vsel %vm1518, %v1508, 2102212464
        %v1521 = vsel %vm1517, %v1505, %v1520
        %v1522 = vsel %vm1516, %v1519, %v1521
        %v1523 = vsel %vm1515, %v1502, %v1505
        %v1524 = vsel %vm1518, %v1511, 920167782
        %v1525 = vsel %vm1517, %v1508, %v1524
        %v1526 = vsel %vm1516, %v1523, %v1525
        %v1527 = vsel %vm1515, %v1505, %v1508
        %v1528 = vsel %vm1518, %v1514, 1326507024
        %v1529 = vsel %vm1517, %v1511, %v1528
        %v1530 = vsel %vm1516, %v1527, %v1529
        %v1531 = vshll.u32 %v1491, 8
        %v1532 = vand.u32 %v1531, 65535
        %v1533 = vshrl.u32 %v1531, 16
        %v1534 = vand.u32 %v1530, 65535
        %v1535 = vshrl.u32 %v1530, 16
        %v1536 = vmul.u32 %v1532, %v1534
        %v1537 = vmul.u32 %v1532, %v1535
        %v1538 = vmul.u32 %v1533, %v1534
        %v1539 = vmul.u32 %v1533, %v1535
        %v1540 = vshll.u32 %v1537, 16
        %v1541 = vshrl.u32 %v1537, 16
        %v1542 = vshll.u32 %v1538, 16
        %v1543 = vshrl.u32 %v1538, 16
        %vm1544 = vc.u32 %v1536, %v1540
        %v1545 = vsel %vm1544, 1, 0
        %v1546 = vadd.s32 %v1536, %v1540
        %v1547 = vadd.s32 %v1539, %v1545
        %vm1548 = vc.u32 %v1546, %v1542
        %v1549 = vsel %vm1548, 1, 0
        %v1550 = vadd.s32 %v1546, %v1542
        %v1551 = vadd.s32 %v1547, %v1549
        %v1552 = vadd.s32 %v1551, %v1541
        %v1553 = vadd.s32 %v1552, %v1543
        %v1554 = vand.u32 %v1531, 65535
        %v1555 = vshrl.u32 %v1531, 16
        %v1556 = vand.u32 %v1526, 65535
        %v1557 = vshrl.u32 %v1526, 16
        %v1558 = vmul.u32 %v1554, %v1556
        %v1559 = vmul.u32 %v1554, %v1557
        %v1560 = vmul.u32 %v1555, %v1556
        %v1561 = vmul.u32 %v1555, %v1557
        %v1562 = vshll.u32 %v1559, 16
        %v1563 = vshrl.u32 %v1559, 16
        %v1564 = vshll.u32 %v1560, 16
        %v1565 = vshrl.u32 %v1560, 16
        %vm1566 = vc.u32 %v1558, %v1562
        %v1567 = vsel %vm1566, 1, 0
        %v1568 = vadd.s32 %v1558, %v1562
        %v1569 = vadd.s32 %v1561, %v1567
        %vm1570 = vc.u32 %v1568, %v1564
        %v1571 = vsel %vm1570, 1, 0
        %v1572 = vadd.s32 %v1568, %v1564
        %v1573 = vadd.s32 %v1569, %v1571
        %v1574 = vadd.s32 %v1573, %v1563
        %v1575 = vadd.s32 %v1574, %v1565
        %v1576 = vmul.u32 %v1531, %v1522
        %v1577 = vadd.s32 %v1553, %v1572
        %vm1578 = vc.u32 %v1553, %v1572
        %v1579 = vadd.s32 %v1575, 1
        %v1580 = vsel %vm1578, %v1579, %v1575
        %v1581 = vadd.s32 %v1576, %v1580
        %v1582 = vadd.s32 %v1581, 536870912
        %v1583 = vshrl.u32 %v1582, 30
        %v1584 = vshll.u32 %v1583, 30
        %v1585 = vsub.s32 %v1581, %v1584
        %vm1586 = vcmp.lt.s32.totalorder %v1585, 0
        %v1587 = vsub.s32 0, %v1585
        %v1588 = vsel %vm1586, %v1587, %v1585
        %v1589 = vclz %v1588
        %v1590 = vsub.s32 %v1589, 2
        %vm1591 = vcmp.gt.s32.totalorder 0, %v1590
        %v1592 = vsel %vm1591, 0, %v1590
        %v1593 = vsub.s32 32, %v1592
        %v1594 = vshll.u32 %v1585, %v1592
        %v1595 = vshrl.u32 %v1577, %v1593
        %v1596 = vor.u32 %v1594, %v1595
        %v1597 = vsub.s32 4294967266, %v1592
        %v1598 = vadd.s32 %v1597, 127
        %v1599 = vshll.u32 %v1598, 23
        %v1600 = vor.u32 4788187, %v1599
        %v1601 = vand.u32 2147483647, %v1600
        %v1603 = vcvt.s32.f32 %v1596
        %v1604 = vmul.f32 %v1603, %v1601
        %v1605 = vxor.u32 %v1604, 2147483648
        %v1606 = vsel %vm1485, %v1605, %v1604
        %v1607 = vsub.s32 4, %v1583
        %v1608 = vsel %vm1485, %v1607, %v1583
        %v1609 = vsel %vm1484, %v387, %v1606
        %v1610 = vsel %vm1484, 0, %v1608
        %v1611 = vmul.f32 %v1609, %v1609
        %v1612 = vmul.f32 %v1611, -0.001358992
        %v1613 = vadd.f32 %v1612, 0.041655596
        %v1614 = vmul.f32 %v1611, %v1613
        %v1615 = vadd.f32 %v1614, -0.4999988
        %v1616 = vmul.f32 %v1611, %v1615
        %v1617 = vadd.f32 1.0, %v1616
        %v1618 = vmul.f32 %v1609, %v1609
        %v1619 = vmul.f32 %v1618, -0.00019511016
        %v1620 = vadd.f32 %v1619, 0.008332121
        %v1621 = vmul.f32 %v1618, %v1620
        %v1622 = vadd.f32 %v1621, -0.16666654
        %v1623 = vmul.f32 %v1618, %v1622
        %v1624 = vadd.f32 %v1623, 1.0
        %v1625 = vmul.f32 %v1624, %v1609
        %vm1626 = vweird.f32 %v387
        %v1627 = vadd.s32 %v1610, 3
        %v1628 = vand.u32 %v1627, 3
        %vm1629 = vcmp.lt.s32.totalorder %v1628, 2
        %vm1630 = vcmp.eq.s32.totalorder %v1628, 0
        %v1631 = vxor.u32 %v1625, 2147483648
        %v1632 = vsel %vm1630, %v1617, %v1631
        %vm1633 = vcmp.eq.s32.totalorder %v1628, 2
        %v1634 = vxor.u32 %v1617, 2147483648
        %v1635 = vsel %vm1633, %v1634, %v1625
        %v1636 = vsel %vm1629, %v1632, %v1635
        %v1637 = vsel %vm1626, nan, %v1636
        %v1638 = vand.u32 2147483647, %v390
        %vm1639 = vcmp.le.f32.partialorder %v1638, 0.7853982
        %vm1640 = vcmp.lt.s32.totalorder %v390, 0
        %v1641 = vand.u32 %v390, 2139095040
        %v1642 = vshrl.u32 %v1641, 23
        %v1643 = vsub.s32 %v1642, 127
        %v1644 = vand.u32 2147483647, %v390
        %v1645 = vand.u32 %v1644, 8388607
        %v1646 = vor.u32 %v1645, 8388608
        %v1647 = vsub.s32 0, %v1646
        %v1648 = vadd.s32 %v1643, 1
        %vm1649 = vcmp.gt.s32.totalorder %v1648, 0
        %v1650 = vsel %vm1649, %v1648, 0
        %v1651 = vshrl.u32 %v1650, 5
        %v1652 = vand.u32 %v1650, 31
        %v1653 = vsub.s32 32, %v1652
        %v1654 = vshrl.u32 683565275, %v1653
        %v1655 = vshll.u32 683565275, %v1652
        %v1656 = vshrl.u32 2475754826, %v1653
        %v1657 = vor.u32 %v1655, %v1656
        %v1658 = vshll.u32 2475754826, %v1652
        %v1659 = vshrl.u32 2131351028, %v1653
        %v1660 = vor.u32 %v1658, %v1659
        %v1661 = vshll.u32 2131351028, %v1652
        %v1662 = vshrl.u32 2102212464, %v1653
        %v1663 = vor.u32 %v1661, %v1662
        %v1664 = vshll.u32 2102212464, %v1652
        %v1665 = vshrl.u32 920167782, %v1653
        %v1666 = vor.u32 %v1664, %v1665
        %v1667 = vshll.u32 920167782, %v1652
        %v1668 = vshrl.u32 1326507024, %v1653
        %v1669 = vor.u32 %v1667, %v1668
        %vm1670 = vcmp.lt.s32.totalorder %v1651, 1
        %vm1671 = vcmp.lt.s32.totalorder %v1651, 2
        %vm1672 = vcmp.lt.s32.totalorder %v1651, 3
        %vm1673 = vcmp.lt.s32.totalorder %v1651, 4
        %v1674 = vsel %vm1670, %v1654, %v1657
        %v1675 = vsel %vm1673, %v1663, 2102212464
        %v1676 = vsel %vm1672, %v1660, %v1675
        %v1677 = vsel %vm1671, %v1674, %v1676
        %v1678 = vsel %vm1670, %v1657, %v1660
        %v1679 = vsel %vm1673, %v1666, 920167782
        %v1680 = vsel %vm1672, %v1663, %v1679
        %v1681 = vsel %vm1671, %v1678, %v1680
        %v1682 = vsel %vm1670, %v1660, %v1663
        %v1683 = vsel %vm1673, %v1669, 1326507024
        %v1684 = vsel %vm1672, %v1666, %v1683
        %v1685 = vsel %vm1671, %v1682, %v1684
        %v1686 = vshll.u32 %v1646, 8
        %v1687 = vand.u32 %v1686, 65535
        %v1688 = vshrl.u32 %v1686, 16
        %v1689 = vand.u32 %v1685, 65535
        %v1690 = vshrl.u32 %v1685, 16
        %v1691 = vmul.u32 %v1687, %v1689
        %v1692 = vmul.u32 %v1687, %v1690
        %v1693 = vmul.u32 %v1688, %v1689
        %v1694 = vmul.u32 %v1688, %v1690
        %v1695 = vshll.u32 %v1692, 16
        %v1696 = vshrl.u32 %v1692, 16
        %v1697 = vshll.u32 %v1693, 16
        %v1698 = vshrl.u32 %v1693, 16
        %vm1699 = vc.u32 %v1691, %v1695
        %v1700 = vsel %vm1699, 1, 0
        %v1701 = vadd.s32 %v1691, %v1695
        %v1702 = vadd.s32 %v1694, %v1700
        %vm1703 = vc.u32 %v1701, %v1697
        %v1704 = vsel %vm1703, 1, 0
        %v1705 = vadd.s32 %v1701, %v1697
        %v1706 = vadd.s32 %v1702, %v1704
        %v1707 = vadd.s32 %v1706, %v1696
        %v1708 = vadd.s32 %v1707, %v1698
        %v1709 = vand.u32 %v1686, 65535
        %v1710 = vshrl.u32 %v1686, 16
        %v1711 = vand.u32 %v1681, 65535
        %v1712 = vshrl.u32 %v1681, 16
        %v1713 = vmul.u32 %v1709, %v1711
        %v1714 = vmul.u32 %v1709, %v1712
        %v1715 = vmul.u32 %v1710, %v1711
        %v1716 = vmul.u32 %v1710, %v1712
        %v1717 = vshll.u32 %v1714, 16
        %v1718 = vshrl.u32 %v1714, 16
        %v1719 = vshll.u32 %v1715, 16
        %v1720 = vshrl.u32 %v1715, 16
        %vm1721 = vc.u32 %v1713, %v1717
        %v1722 = vsel %vm1721, 1, 0
        %v1723 = vadd.s32 %v1713, %v1717
        %v1724 = vadd.s32 %v1716, %v1722
        %vm1725 = vc.u32 %v1723, %v1719
        %v1726 = vsel %vm1725, 1, 0
        %v1727 = vadd.s32 %v1723, %v1719
        %v1728 = vadd.s32 %v1724, %v1726
        %v1729 = vadd.s32 %v1728, %v1718
        %v1730 = vadd.s32 %v1729, %v1720
        %v1731 = vmul.u32 %v1686, %v1677
        %v1732 = vadd.s32 %v1708, %v1727
        %vm1733 = vc.u32 %v1708, %v1727
        %v1734 = vadd.s32 %v1730, 1
        %v1735 = vsel %vm1733, %v1734, %v1730
        %v1736 = vadd.s32 %v1731, %v1735
        %v1737 = vadd.s32 %v1736, 536870912
        %v1738 = vshrl.u32 %v1737, 30
        %v1739 = vshll.u32 %v1738, 30
        %v1740 = vsub.s32 %v1736, %v1739
        %vm1741 = vcmp.lt.s32.totalorder %v1740, 0
        %v1742 = vsub.s32 0, %v1740
        %v1743 = vsel %vm1741, %v1742, %v1740
        %v1744 = vclz %v1743
        %v1745 = vsub.s32 %v1744, 2
        %vm1746 = vcmp.gt.s32.totalorder 0, %v1745
        %v1747 = vsel %vm1746, 0, %v1745
        %v1748 = vsub.s32 32, %v1747
        %v1749 = vshll.u32 %v1740, %v1747
        %v1750 = vshrl.u32 %v1732, %v1748
        %v1751 = vor.u32 %v1749, %v1750
        %v1752 = vsub.s32 4294967266, %v1747
        %v1753 = vadd.s32 %v1752, 127
        %v1754 = vshll.u32 %v1753, 23
        %v1755 = vor.u32 4788187, %v1754
        %v1756 = vand.u32 2147483647, %v1755
        %v1758 = vcvt.s32.f32 %v1751
        %v1759 = vmul.f32 %v1758, %v1756
        %v1760 = vxor.u32 %v1759, 2147483648
        %v1761 = vsel %vm1640, %v1760, %v1759
        %v1762 = vsub.s32 4, %v1738
        %v1763 = vsel %vm1640, %v1762, %v1738
        %v1764 = vsel %vm1639, %v390, %v1761
        %v1765 = vsel %vm1639, 0, %v1763
        %v1766 = vmul.f32 %v1764, %v1764
        %v1767 = vmul.f32 %v1766, -0.001358992
        %v1768 = vadd.f32 %v1767, 0.041655596
        %v1769 = vmul.f32 %v1766, %v1768
        %v1770 = vadd.f32 %v1769, -0.4999988
        %v1771 = vmul.f32 %v1766, %v1770
        %v1772 = vadd.f32 1.0, %v1771
        %v1773 = vmul.f32 %v1764, %v1764
        %v1774 = vmul.f32 %v1773, -0.00019511016
        %v1775 = vadd.f32 %v1774, 0.008332121
        %v1776 = vmul.f32 %v1773, %v1775
        %v1777 = vadd.f32 %v1776, -0.16666654
        %v1778 = vmul.f32 %v1773, %v1777
        %v1779 = vadd.f32 %v1778, 1.0
        %v1780 = vmul.f32 %v1779, %v1764
        %vm1781 = vweird.f32 %v390
        %v1782 = vadd.s32 %v1765, 3
        %v1783 = vand.u32 %v1782, 3
        %vm1784 = vcmp.lt.s32.totalorder %v1783, 2
        %vm1785 = vcmp.eq.s32.totalorder %v1783, 0
        %v1786 = vxor.u32 %v1780, 2147483648
        %v1787 = vsel %vm1785, %v1772, %v1786
        %vm1788 = vcmp.eq.s32.totalorder %v1783, 2
        %v1789 = vxor.u32 %v1772, 2147483648
        %v1790 = vsel %vm1788, %v1789, %v1780
        %v1791 = vsel %vm1784, %v1787, %v1790
        %v1792 = vsel %vm1781, nan, %v1791
        %v1793 = vand.u32 2147483647, %v393
        %vm1794 = vcmp.le.f32.partialorder %v1793, 0.7853982
        %vm1795 = vcmp.lt.s32.totalorder %v393, 0
        %v1796 = vand.u32 %v393, 2139095040
        %v1797 = vshrl.u32 %v1796, 23
        %v1798 = vsub.s32 %v1797, 127
        %v1799 = vand.u32 2147483647, %v393
        %v1800 = vand.u32 %v1799, 8388607
        %v1801 = vor.u32 %v1800, 8388608
        %v1802 = vsub.s32 0, %v1801
        %v1803 = vadd.s32 %v1798, 1
        %vm1804 = vcmp.gt.s32.totalorder %v1803, 0
        %v1805 = vsel %vm1804, %v1803, 0
        %v1806 = vshrl.u32 %v1805, 5
        %v1807 = vand.u32 %v1805, 31
        %v1808 = vsub.s32 32, %v1807
        %v1809 = vshrl.u32 683565275, %v1808
        %v1810 = vshll.u32 683565275, %v1807
        %v1811 = vshrl.u32 2475754826, %v1808
        %v1812 = vor.u32 %v1810, %v1811
        %v1813 = vshll.u32 2475754826, %v1807
        %v1814 = vshrl.u32 2131351028, %v1808
        %v1815 = vor.u32 %v1813, %v1814
        %v1816 = vshll.u32 2131351028, %v1807
        %v1817 = vshrl.u32 2102212464, %v1808
        %v1818 = vor.u32 %v1816, %v1817
        %v1819 = vshll.u32 2102212464, %v1807
        %v1820 = vshrl.u32 920167782, %v1808
        %v1821 = vor.u32 %v1819, %v1820
        %v1822 = vshll.u32 920167782, %v1807
        %v1823 = vshrl.u32 1326507024, %v1808
        %v1824 = vor.u32 %v1822, %v1823
        %vm1825 = vcmp.lt.s32.totalorder %v1806, 1
        %vm1826 = vcmp.lt.s32.totalorder %v1806, 2
        %vm1827 = vcmp.lt.s32.totalorder %v1806, 3
        %vm1828 = vcmp.lt.s32.totalorder %v1806, 4
        %v1829 = vsel %vm1825, %v1809, %v1812
        %v1830 = vsel %vm1828, %v1818, 2102212464
        %v1831 = vsel %vm1827, %v1815, %v1830
        %v1832 = vsel %vm1826, %v1829, %v1831
        %v1833 = vsel %vm1825, %v1812, %v1815
        %v1834 = vsel %vm1828, %v1821, 920167782
        %v1835 = vsel %vm1827, %v1818, %v1834
        %v1836 = vsel %vm1826, %v1833, %v1835
        %v1837 = vsel %vm1825, %v1815, %v1818
        %v1838 = vsel %vm1828, %v1824, 1326507024
        %v1839 = vsel %vm1827, %v1821, %v1838
        %v1840 = vsel %vm1826, %v1837, %v1839
        %v1841 = vshll.u32 %v1801, 8
        %v1842 = vand.u32 %v1841, 65535
        %v1843 = vshrl.u32 %v1841, 16
        %v1844 = vand.u32 %v1840, 65535
        %v1845 = vshrl.u32 %v1840, 16
        %v1846 = vmul.u32 %v1842, %v1844
        %v1847 = vmul.u32 %v1842, %v1845
        %v1848 = vmul.u32 %v1843, %v1844
        %v1849 = vmul.u32 %v1843, %v1845
        %v1850 = vshll.u32 %v1847, 16
        %v1851 = vshrl.u32 %v1847, 16
        %v1852 = vshll.u32 %v1848, 16
        %v1853 = vshrl.u32 %v1848, 16
        %vm1854 = vc.u32 %v1846, %v1850
        %v1855 = vsel %vm1854, 1, 0
        %v1856 = vadd.s32 %v1846, %v1850
        %v1857 = vadd.s32 %v1849, %v1855
        %vm1858 = vc.u32 %v1856, %v1852
        %v1859 = vsel %vm1858, 1, 0
        %v1860 = vadd.s32 %v1856, %v1852
        %v1861 = vadd.s32 %v1857, %v1859
        %v1862 = vadd.s32 %v1861, %v1851
        %v1863 = vadd.s32 %v1862, %v1853
        %v1864 = vand.u32 %v1841, 65535
        %v1865 = vshrl.u32 %v1841, 16
        %v1866 = vand.u32 %v1836, 65535
        %v1867 = vshrl.u32 %v1836, 16
        %v1868 = vmul.u32 %v1864, %v1866
        %v1869 = vmul.u32 %v1864, %v1867
        %v1870 = vmul.u32 %v1865, %v1866
        %v1871 = vmul.u32 %v1865, %v1867
        %v1872 = vshll.u32 %v1869, 16
        %v1873 = vshrl.u32 %v1869, 16
        %v1874 = vshll.u32 %v1870, 16
        %v1875 = vshrl.u32 %v1870, 16
        %vm1876 = vc.u32 %v1868, %v1872
        %v1877 = vsel %vm1876, 1, 0
        %v1878 = vadd.s32 %v1868, %v1872
        %v1879 = vadd.s32 %v1871, %v1877
        %vm1880 = vc.u32 %v1878, %v1874
        %v1881 = vsel %vm1880, 1, 0
        %v1882 = vadd.s32 %v1878, %v1874
        %v1883 = vadd.s32 %v1879, %v1881
        %v1884 = vadd.s32 %v1883, %v1873
        %v1885 = vadd.s32 %v1884, %v1875
        %v1886 = vmul.u32 %v1841, %v1832
        %v1887 = vadd.s32 %v1863, %v1882
        %vm1888 = vc.u32 %v1863, %v1882
        %v1889 = vadd.s32 %v1885, 1
        %v1890 = vsel %vm1888, %v1889, %v1885
        %v1891 = vadd.s32 %v1886, %v1890
        %v1892 = vadd.s32 %v1891, 536870912
        %v1893 = vshrl.u32 %v1892, 30
        %v1894 = vshll.u32 %v1893, 30
        %v1895 = vsub.s32 %v1891, %v1894
        %vm1896 = vcmp.lt.s32.totalorder %v1895, 0
        %v1897 = vsub.s32 0, %v1895
        %v1898 = vsel %vm1896, %v1897, %v1895
        %v1899 = vclz %v1898
        %v1900 = vsub.s32 %v1899, 2
        %vm1901 = vcmp.gt.s32.totalorder 0, %v1900
        %v1902 = vsel %vm1901, 0, %v1900
        %v1903 = vsub.s32 32, %v1902
        %v1904 = vshll.u32 %v1895, %v1902
        %v1905 = vshrl.u32 %v1887, %v1903
        %v1906 = vor.u32 %v1904, %v1905
        %v1907 = vsub.s32 4294967266, %v1902
        %v1908 = vadd.s32 %v1907, 127
        %v1909 = vshll.u32 %v1908, 23
        %v1910 = vor.u32 4788187, %v1909
        %v1911 = vand.u32 2147483647, %v1910
        %v1913 = vcvt.s32.f32 %v1906
        %v1914 = vmul.f32 %v1913, %v1911
        %v1915 = vxor.u32 %v1914, 2147483648
        %v1916 = vsel %vm1795, %v1915, %v1914
        %v1917 = vsub.s32 4, %v1893
        %v1918 = vsel %vm1795, %v1917, %v1893
        %v1919 = vsel %vm1794, %v393, %v1916
        %v1920 = vsel %vm1794, 0, %v1918
        %v1921 = vmul.f32 %v1919, %v1919
        %v1922 = vmul.f32 %v1921, -0.001358992
        %v1923 = vadd.f32 %v1922, 0.041655596
        %v1924 = vmul.f32 %v1921, %v1923
        %v1925 = vadd.f32 %v1924, -0.4999988
        %v1926 = vmul.f32 %v1921, %v1925
        %v1927 = vadd.f32 1.0, %v1926
        %v1928 = vmul.f32 %v1919, %v1919
        %v1929 = vmul.f32 %v1928, -0.00019511016
        %v1930 = vadd.f32 %v1929, 0.008332121
        %v1931 = vmul.f32 %v1928, %v1930
        %v1932 = vadd.f32 %v1931, -0.16666654
        %v1933 = vmul.f32 %v1928, %v1932
        %v1934 = vadd.f32 %v1933, 1.0
        %v1935 = vmul.f32 %v1934, %v1919
        %vm1936 = vweird.f32 %v393
        %v1937 = vadd.s32 %v1920, 3
        %v1938 = vand.u32 %v1937, 3
        %vm1939 = vcmp.lt.s32.totalorder %v1938, 2
        %vm1940 = vcmp.eq.s32.totalorder %v1938, 0
        %v1941 = vxor.u32 %v1935, 2147483648
        %v1942 = vsel %vm1940, %v1927, %v1941
        %vm1943 = vcmp.eq.s32.totalorder %v1938, 2
        %v1944 = vxor.u32 %v1927, 2147483648
        %v1945 = vsel %vm1943, %v1944, %v1935
        %v1946 = vsel %vm1939, %v1942, %v1945
        %v1947 = vsel %vm1936, nan, %v1946
        %v1948 = vand.u32 2147483647, %v396
        %vm1949 = vcmp.le.f32.partialorder %v1948, 0.7853982
        %vm1950 = vcmp.lt.s32.totalorder %v396, 0
        %v1951 = vand.u32 %v396, 2139095040
        %v1952 = vshrl.u32 %v1951, 23
        %v1953 = vsub.s32 %v1952, 127
        %v1954 = vand.u32 2147483647, %v396
        %v1955 = vand.u32 %v1954, 8388607
        %v1956 = vor.u32 %v1955, 8388608
        %v1957 = vsub.s32 0, %v1956
        %v1958 = vadd.s32 %v1953, 1
        %vm1959 = vcmp.gt.s32.totalorder %v1958, 0
        %v1960 = vsel %vm1959, %v1958, 0
        %v1961 = vshrl.u32 %v1960, 5
        %v1962 = vand.u32 %v1960, 31
        %v1963 = vsub.s32 32, %v1962
        %v1964 = vshrl.u32 683565275, %v1963
        %v1965 = vshll.u32 683565275, %v1962
        %v1966 = vshrl.u32 2475754826, %v1963
        %v1967 = vor.u32 %v1965, %v1966
        %v1968 = vshll.u32 2475754826, %v1962
        %v1969 = vshrl.u32 2131351028, %v1963
        %v1970 = vor.u32 %v1968, %v1969
        %v1971 = vshll.u32 2131351028, %v1962
        %v1972 = vshrl.u32 2102212464, %v1963
        %v1973 = vor.u32 %v1971, %v1972
        %v1974 = vshll.u32 2102212464, %v1962
        %v1975 = vshrl.u32 920167782, %v1963
        %v1976 = vor.u32 %v1974, %v1975
        %v1977 = vshll.u32 920167782, %v1962
        %v1978 = vshrl.u32 1326507024, %v1963
        %v1979 = vor.u32 %v1977, %v1978
        %vm1980 = vcmp.lt.s32.totalorder %v1961, 1
        %vm1981 = vcmp.lt.s32.totalorder %v1961, 2
        %vm1982 = vcmp.lt.s32.totalorder %v1961, 3
        %vm1983 = vcmp.lt.s32.totalorder %v1961, 4
        %v1984 = vsel %vm1980, %v1964, %v1967
        %v1985 = vsel %vm1983, %v1973, 2102212464
        %v1986 = vsel %vm1982, %v1970, %v1985
        %v1987 = vsel %vm1981, %v1984, %v1986
        %v1988 = vsel %vm1980, %v1967, %v1970
        %v1989 = vsel %vm1983, %v1976, 920167782
        %v1990 = vsel %vm1982, %v1973, %v1989
        %v1991 = vsel %vm1981, %v1988, %v1990
        %v1992 = vsel %vm1980, %v1970, %v1973
        %v1993 = vsel %vm1983, %v1979, 1326507024
        %v1994 = vsel %vm1982, %v1976, %v1993
        %v1995 = vsel %vm1981, %v1992, %v1994
        %v1996 = vshll.u32 %v1956, 8
        %v1997 = vand.u32 %v1996, 65535
        %v1998 = vshrl.u32 %v1996, 16
        %v1999 = vand.u32 %v1995, 65535
        %v2000 = vshrl.u32 %v1995, 16
        %v2001 = vmul.u32 %v1997, %v1999
        %v2002 = vmul.u32 %v1997, %v2000
        %v2003 = vmul.u32 %v1998, %v1999
        %v2004 = vmul.u32 %v1998, %v2000
        %v2005 = vshll.u32 %v2002, 16
        %v2006 = vshrl.u32 %v2002, 16
        %v2007 = vshll.u32 %v2003, 16
        %v2008 = vshrl.u32 %v2003, 16
        %vm2009 = vc.u32 %v2001, %v2005
        %v2010 = vsel %vm2009, 1, 0
        %v2011 = vadd.s32 %v2001, %v2005
        %v2012 = vadd.s32 %v2004, %v2010
        %vm2013 = vc.u32 %v2011, %v2007
        %v2014 = vsel %vm2013, 1, 0
        %v2015 = vadd.s32 %v2011, %v2007
        %v2016 = vadd.s32 %v2012, %v2014
        %v2017 = vadd.s32 %v2016, %v2006
        %v2018 = vadd.s32 %v2017, %v2008
        %v2019 = vand.u32 %v1996, 65535
        %v2020 = vshrl.u32 %v1996, 16
        %v2021 = vand.u32 %v1991, 65535
        %v2022 = vshrl.u32 %v1991, 16
        %v2023 = vmul.u32 %v2019, %v2021
        %v2024 = vmul.u32 %v2019, %v2022
        %v2025 = vmul.u32 %v2020, %v2021
        %v2026 = vmul.u32 %v2020, %v2022
        %v2027 = vshll.u32 %v2024, 16
        %v2028 = vshrl.u32 %v2024, 16
        %v2029 = vshll.u32 %v2025, 16
        %v2030 = vshrl.u32 %v2025, 16
        %vm2031 = vc.u32 %v2023, %v2027
        %v2032 = vsel %vm2031, 1, 0
        %v2033 = vadd.s32 %v2023, %v2027
        %v2034 = vadd.s32 %v2026, %v2032
        %vm2035 = vc.u32 %v2033, %v2029
        %v2036 = vsel %vm2035, 1, 0
        %v2037 = vadd.s32 %v2033, %v2029
        %v2038 = vadd.s32 %v2034, %v2036
        %v2039 = vadd.s32 %v2038, %v2028
        %v2040 = vadd.s32 %v2039, %v2030
        %v2041 = vmul.u32 %v1996, %v1987
        %v2042 = vadd.s32 %v2018, %v2037
        %vm2043 = vc.u32 %v2018, %v2037
        %v2044 = vadd.s32 %v2040, 1
        %v2045 = vsel %vm2043, %v2044, %v2040
        %v2046 = vadd.s32 %v2041, %v2045
        %v2047 = vadd.s32 %v2046, 536870912
        %v2048 = vshrl.u32 %v2047, 30
        %v2049 = vshll.u32 %v2048, 30
        %v2050 = vsub.s32 %v2046, %v2049
        %vm2051 = vcmp.lt.s32.totalorder %v2050, 0
        %v2052 = vsub.s32 0, %v2050
        %v2053 = vsel %vm2051, %v2052, %v2050
        %v2054 = vclz %v2053
        %v2055 = vsub.s32 %v2054, 2
        %vm2056 = vcmp.gt.s32.totalorder 0, %v2055
        %v2057 = vsel %vm2056, 0, %v2055
        %v2058 = vsub.s32 32, %v2057
        %v2059 = vshll.u32 %v2050, %v2057
        %v2060 = vshrl.u32 %v2042, %v2058
        %v2061 = vor.u32 %v2059, %v2060
        %v2062 = vsub.s32 4294967266, %v2057
        %v2063 = vadd.s32 %v2062, 127
        %v2064 = vshll.u32 %v2063, 23
        %v2065 = vor.u32 4788187, %v2064
        %v2066 = vand.u32 2147483647, %v2065
        %v2068 = vcvt.s32.f32 %v2061
        %v2069 = vmul.f32 %v2068, %v2066
        %v2070 = vxor.u32 %v2069, 2147483648
        %v2071 = vsel %vm1950, %v2070, %v2069
        %v2072 = vsub.s32 4, %v2048
        %v2073 = vsel %vm1950, %v2072, %v2048
        %v2074 = vsel %vm1949, %v396, %v2071
        %v2075 = vsel %vm1949, 0, %v2073
        %v2076 = vmul.f32 %v2074, %v2074
        %v2077 = vmul.f32 %v2076, -0.001358992
        %v2078 = vadd.f32 %v2077, 0.041655596
        %v2079 = vmul.f32 %v2076, %v2078
        %v2080 = vadd.f32 %v2079, -0.4999988
        %v2081 = vmul.f32 %v2076, %v2080
        %v2082 = vadd.f32 1.0, %v2081
        %v2083 = vmul.f32 %v2074, %v2074
        %v2084 = vmul.f32 %v2083, -0.00019511016
        %v2085 = vadd.f32 %v2084, 0.008332121
        %v2086 = vmul.f32 %v2083, %v2085
        %v2087 = vadd.f32 %v2086, -0.16666654
        %v2088 = vmul.f32 %v2083, %v2087
        %v2089 = vadd.f32 %v2088, 1.0
        %v2090 = vmul.f32 %v2089, %v2074
        %vm2091 = vweird.f32 %v396
        %v2092 = vadd.s32 %v2075, 3
        %v2093 = vand.u32 %v2092, 3
        %vm2094 = vcmp.lt.s32.totalorder %v2093, 2
        %vm2095 = vcmp.eq.s32.totalorder %v2093, 0
        %v2096 = vxor.u32 %v2090, 2147483648
        %v2097 = vsel %vm2095, %v2082, %v2096
        %vm2098 = vcmp.eq.s32.totalorder %v2093, 2
        %v2099 = vxor.u32 %v2082, 2147483648
        %v2100 = vsel %vm2098, %v2099, %v2090
        %v2101 = vsel %vm2094, %v2097, %v2100
        %v2102 = vsel %vm2091, nan, %v2101
        %v2103 = vld [vmem:[%s2] sm:$0xf]
        %v2104 = vld [vmem:[%s2 + $0x4] sm:$0xf]
        %v2105 = vld [vmem:[%s2 + $0x8] sm:$0xf]
        %v2106 = vld [vmem:[%s2 + $0xc] sm:$0xf]
        %v2107 = vld [vmem:[%s2 + $0x10] sm:$0xf]
        %v2108 = vld [vmem:[%s2 + $0x14] sm:$0xf]
        %v2109 = vld [vmem:[%s2 + $0x18] sm:$0xf]
        %v2110 = vld [vmem:[%s2 + $0x1c] sm:$0xf]
        %v2111 = vld [vmem:[%s2 + $0x20] sm:$0xf]
        %v2112 = vld [vmem:[%s2 + $0x24] sm:$0xf]
        %v2113 = vld [vmem:[%s2 + $0x28] sm:$0xf]
        %v2114 = vld [vmem:[%s2 + $0x2c] sm:$0xf]
        %v2115 = vld [vmem:[%s2 + $0x30] sm:$0xf]
        %v2116 = vld [vmem:[%s2 + $0x34] sm:$0xf]
        %v2117 = vld [vmem:[%s2 + $0x38] sm:$0xf]
        %v2118 = vld [vmem:[%s2 + $0x3c] sm:$0xf]
        %v2119 = vpack.c.bf16 %v707, %v552
        %v2120 = vpack.c.bf16 %v1017, %v862
        %v2121 = vpack.c.bf16 %v1327, %v1172
        %v2122 = vpack.c.bf16 %v1637, %v1482
        %v2123 = vpack.c.bf16 %v1947, %v1792
        %v2124 = vpack.c.bf16 %v2102, %v2102
        %v2125 = vld [vmem:[%s3] sm:$0xf]
        %v2126 = vld [vmem:[%s3 + $0x4] sm:$0xf]
        %v2127 = vld [vmem:[%s3 + $0x8] sm:$0xf]
        %v2128 = vld [vmem:[%s3 + $0xc] sm:$0xf]
        %v2129 = vld [vmem:[%s3 + $0x10] sm:$0xf]
        %v2130 = vld [vmem:[%s3 + $0x14] sm:$0xf]
        %v2131 = vld [vmem:[%s3 + $0x18] sm:$0xf]
        %v2132 = vld [vmem:[%s3 + $0x1c] sm:$0xf]
        %v2133 = vld [vmem:[%s3 + $0x20] sm:$0xf]
        %v2134 = vld [vmem:[%s3 + $0x24] sm:$0xf]
        %v2135 = vld [vmem:[%s3 + $0x28] sm:$0xf]
        %v2136 = vld [vmem:[%s3 + $0x2c] sm:$0xf]
        %v2137 = vld [vmem:[%s3 + $0x30] sm:$0xf]
        %v2138 = vld [vmem:[%s3 + $0x34] sm:$0xf]
        %v2139 = vld [vmem:[%s3 + $0x38] sm:$0xf]
        %v2140 = vld [vmem:[%s3 + $0x3c] sm:$0xf]
        %v2141 = vpack.c.bf16 %v302, %v302
        %v2158 = vunpack.c.l.b16 %v2125
        %v2159 = vunpack.c.l.b16 %v2126
        %v2160 = vunpack.c.l.b16 %v2127
        %v2161 = vunpack.c.l.b16 %v2128
        %v2162 = vunpack.c.l.b16 %v2129
        %v2163 = vunpack.c.l.b16 %v2130
        %v2164 = vunpack.c.l.b16 %v2131
        %v2165 = vunpack.c.l.b16 %v2132
        %v2166 = vunpack.c.l.b16 %v2133
        %v2167 = vunpack.c.l.b16 %v2134
        %v2168 = vunpack.c.l.b16 %v2135
        %v2169 = vunpack.c.l.b16 %v2136
        %v2170 = vunpack.c.l.b16 %v2137
        %v2171 = vunpack.c.l.b16 %v2138
        %v2172 = vunpack.c.l.b16 %v2139
        %v2173 = vunpack.c.l.b16 %v2140
        %v2174 = vpack.c.b16 %v2159, %v2158
        %v2175 = vpack.c.b16 %v2161, %v2160
        %v2176 = vpack.c.b16 %v2163, %v2162
        %v2177 = vpack.c.b16 %v2165, %v2164
        %v2178 = vpack.c.b16 %v2167, %v2166
        %v2179 = vpack.c.b16 %v2169, %v2168
        %v2180 = vpack.c.b16 %v2171, %v2170
        %v2181 = vpack.c.b16 %v2173, %v2172
        %v2183 = vsel %vm314, %v2174, 0
        %v2186 = vsel %vm314, %v2175, 0
        %v2189 = vsel %vm314, %v2176, 0
        %v2192 = vsel %vm314, %v2177, 0
        %v2195 = vsel %vm314, %v2178, 0
        %v2198 = vsel %vm314, %v2179, 0
        %v2201 = vsel %vm314, %v2180, 0
        %v2204 = vsel %vm314, %v2181, 0
        %vm2206 = vcmask 1043456
        %v2208 = vsel %vm2206, %v2141, 0
        %2210 = vmatpush.bf16.msra.mxu0 0
        %2211 = vmatpush.bf16.msra.mxu0 0
        %2212 = vmatpush.bf16.msra.mxu0 0
        %2213 = vmatpush.bf16.msra.mxu0 0
        %2214 = vmatpush.bf16.msra.mxu0 0
        %2215 = vmatpush.bf16.msra.mxu0 0
        %2216 = vmatpush.bf16.msra.mxu0 0
        %2217 = vmatpush.bf16.msra.mxu0 %v2208
        %2218 = vmatmul.bf16.gmra.mxu0 %v2183
        %v2219 = vpop.f32.mrf.mxu0
        %v2220 = vadd.f32 0.0, %v2219
        %v2221 = vpop.f32.mrf.mxu0
        %v2222 = vadd.f32 0.0, %v2221
        %2223 = vmatmul.bf16.gmra.mxu0 %v2186
        %v2224 = vpop.f32.mrf.mxu0
        %v2225 = vadd.f32 0.0, %v2224
        %v2226 = vpop.f32.mrf.mxu0
        %v2227 = vadd.f32 0.0, %v2226
        %2228 = vmatmul.bf16.gmra.mxu0 %v2189
        %v2229 = vpop.f32.mrf.mxu0
        %v2230 = vadd.f32 0.0, %v2229
        %v2231 = vpop.f32.mrf.mxu0
        %v2232 = vadd.f32 0.0, %v2231
        %2233 = vmatmul.bf16.gmra.mxu0 %v2192
        %v2234 = vpop.f32.mrf.mxu0
        %v2235 = vadd.f32 0.0, %v2234
        %v2236 = vpop.f32.mrf.mxu0
        %v2237 = vadd.f32 0.0, %v2236
        %2238 = vmatmul.bf16.gmra.mxu0 %v2195
        %v2239 = vpop.f32.mrf.mxu0
        %v2240 = vadd.f32 0.0, %v2239
        %v2241 = vpop.f32.mrf.mxu0
        %v2242 = vadd.f32 0.0, %v2241
        %2243 = vmatmul.bf16.gmra.mxu0 %v2198
        %v2244 = vpop.f32.mrf.mxu0
        %v2245 = vadd.f32 0.0, %v2244
        %v2246 = vpop.f32.mrf.mxu0
        %v2247 = vadd.f32 0.0, %v2246
        %2248 = vmatmul.bf16.gmra.mxu0 %v2201
        %v2249 = vpop.f32.mrf.mxu0
        %v2250 = vadd.f32 0.0, %v2249
        %v2251 = vpop.f32.mrf.mxu0
        %v2252 = vadd.f32 0.0, %v2251
        %2253 = vmatmul.bf16.gmra.mxu0 %v2204
        %v2254 = vpop.f32.mrf.mxu0
        %v2255 = vadd.f32 0.0, %v2254
        %v2256 = vpop.f32.mrf.mxu0
        %v2257 = vadd.f32 0.0, %v2256
        %2258 = vdwg.mxu0
        %v2275 = vunpack.c.l.b16 %v2103
        %v2276 = vunpack.c.l.b16 %v2104
        %v2277 = vunpack.c.l.b16 %v2105
        %v2278 = vunpack.c.l.b16 %v2106
        %v2279 = vunpack.c.l.b16 %v2107
        %v2280 = vunpack.c.l.b16 %v2108
        %v2281 = vunpack.c.l.b16 %v2109
        %v2282 = vunpack.c.l.b16 %v2110
        %v2283 = vunpack.c.l.b16 %v2111
        %v2284 = vunpack.c.l.b16 %v2112
        %v2285 = vunpack.c.l.b16 %v2113
        %v2286 = vunpack.c.l.b16 %v2114
        %v2287 = vunpack.c.l.b16 %v2115
        %v2288 = vunpack.c.l.b16 %v2116
        %v2289 = vunpack.c.l.b16 %v2117
        %v2290 = vunpack.c.l.b16 %v2118
        %v2291 = vpack.c.b16 %v2276, %v2275
        %v2292 = vpack.c.b16 %v2278, %v2277
        %v2293 = vpack.c.b16 %v2280, %v2279
        %v2294 = vpack.c.b16 %v2282, %v2281
        %v2295 = vpack.c.b16 %v2284, %v2283
        %v2296 = vpack.c.b16 %v2286, %v2285
        %v2297 = vpack.c.b16 %v2288, %v2287
        %v2298 = vpack.c.b16 %v2290, %v2289
        %vm2299 = vcmask 719872
        %v2301 = vsel %vm2299, %v2291, 0
        %v2304 = vsel %vm2299, %v2292, 0
        %v2307 = vsel %vm2299, %v2293, 0
        %v2310 = vsel %vm2299, %v2294, 0
        %v2313 = vsel %vm2299, %v2295, 0
        %v2316 = vsel %vm2299, %v2296, 0
        %v2319 = vsel %vm2299, %v2297, 0
        %v2322 = vsel %vm2299, %v2298, 0
        %v2325 = vsel %vm2206, %v2124, 0
        %2327 = vmatpush.bf16.msra.mxu0 0
        %2328 = vmatpush.bf16.msra.mxu0 0
        %2329 = vmatpush.bf16.msra.mxu0 %v2325
        %2330 = vmatpush.bf16.msra.mxu0 %v2123
        %2331 = vmatpush.bf16.msra.mxu0 %v2122
        %2332 = vmatpush.bf16.msra.mxu0 %v2121
        %2333 = vmatpush.bf16.msra.mxu0 %v2120
        %2334 = vmatpush.bf16.msra.mxu0 %v2119
        %2335 = vmatmul.bf16.gmra.mxu0 %v2301
        %v2336 = vpop.f32.mrf.mxu0
        %v2337 = vadd.f32 %v2220, %v2336
        %v2338 = vpop.f32.mrf.mxu0
        %v2339 = vadd.f32 %v2222, %v2338
        %2340 = vmatmul.bf16.gmra.mxu0 %v2304
        %v2341 = vpop.f32.mrf.mxu0
        %v2342 = vadd.f32 %v2225, %v2341
        %v2343 = vpop.f32.mrf.mxu0
        %v2344 = vadd.f32 %v2227, %v2343
        %2345 = vmatmul.bf16.gmra.mxu0 %v2307
        %v2346 = vpop.f32.mrf.mxu0
        %v2347 = vadd.f32 %v2230, %v2346
        %v2348 = vpop.f32.mrf.mxu0
        %v2349 = vadd.f32 %v2232, %v2348
        %2350 = vmatmul.bf16.gmra.mxu0 %v2310
        %v2351 = vpop.f32.mrf.mxu0
        %v2352 = vadd.f32 %v2235, %v2351
        %v2353 = vpop.f32.mrf.mxu0
        %v2354 = vadd.f32 %v2237, %v2353
        %2355 = vmatmul.bf16.gmra.mxu0 %v2313
        %v2356 = vpop.f32.mrf.mxu0
        %v2357 = vadd.f32 %v2240, %v2356
        %v2358 = vpop.f32.mrf.mxu0
        %v2359 = vadd.f32 %v2242, %v2358
        %2360 = vmatmul.bf16.gmra.mxu0 %v2316
        %v2361 = vpop.f32.mrf.mxu0
        %v2362 = vadd.f32 %v2245, %v2361
        %v2363 = vpop.f32.mrf.mxu0
        %v2364 = vadd.f32 %v2247, %v2363
        %2365 = vmatmul.bf16.gmra.mxu0 %v2319
        %v2366 = vpop.f32.mrf.mxu0
        %v2367 = vadd.f32 %v2250, %v2366
        %v2368 = vpop.f32.mrf.mxu0
        %v2369 = vadd.f32 %v2252, %v2368
        %2370 = vmatmul.bf16.gmra.mxu0 %v2322
        %v2371 = vpop.f32.mrf.mxu0
        %v2372 = vadd.f32 %v2255, %v2371
        %v2373 = vpop.f32.mrf.mxu0
        %v2374 = vadd.f32 %v2257, %v2373
        %2375 = vdwg.mxu0
        %v2376 = vmax.f32 %v2337, 0.0
        %v2377 = vmax.f32 %v2339, 0.0
        %v2378 = vmax.f32 %v2342, 0.0
        %v2379 = vmax.f32 %v2344, 0.0
        %v2380 = vmax.f32 %v2347, 0.0
        %v2381 = vmax.f32 %v2349, 0.0
        %v2382 = vmax.f32 %v2352, 0.0
        %v2383 = vmax.f32 %v2354, 0.0
        %v2384 = vmax.f32 %v2357, 0.0
        %v2385 = vmax.f32 %v2359, 0.0
        %v2386 = vmax.f32 %v2362, 0.0
        %v2387 = vmax.f32 %v2364, 0.0
        %v2388 = vmax.f32 %v2367, 0.0
        %v2389 = vmax.f32 %v2369, 0.0
        %v2390 = vmax.f32 %v2372, 0.0
        %v2391 = vmax.f32 %v2374, 0.0
        %v2392 = vld [vmem:[%s4] sm:$0xf]
        %v2393 = vld [vmem:[%s4 + $0x4] sm:$0xf]
        %v2394 = vld [vmem:[%s4 + $0x8] sm:$0xf]
        %v2395 = vld [vmem:[%s4 + $0xc] sm:$0xf]
        %v2396 = vld [vmem:[%s4 + $0x10] sm:$0xf]
        %v2397 = vld [vmem:[%s4 + $0x14] sm:$0xf]
        %v2398 = vld [vmem:[%s4 + $0x18] sm:$0xf]
        %v2399 = vld [vmem:[%s4 + $0x1c] sm:$0xf]
        %v2400 = vld [vmem:[%s4 + $0x20] sm:$0xf]
        %v2401 = vld [vmem:[%s4 + $0x24] sm:$0xf]
        %v2402 = vld [vmem:[%s4 + $0x28] sm:$0xf]
        %v2403 = vld [vmem:[%s4 + $0x2c] sm:$0xf]
        %v2404 = vld [vmem:[%s4 + $0x30] sm:$0xf]
        %v2405 = vld [vmem:[%s4 + $0x34] sm:$0xf]
        %v2406 = vld [vmem:[%s4 + $0x38] sm:$0xf]
        %v2407 = vld [vmem:[%s4 + $0x3c] sm:$0xf]
        %v2408 = vpack.c.bf16 %v2377, %v2376
        %v2409 = vpack.c.bf16 %v2379, %v2378
        %v2410 = vpack.c.bf16 %v2381, %v2380
        %v2411 = vpack.c.bf16 %v2383, %v2382
        %v2412 = vpack.c.bf16 %v2385, %v2384
        %v2413 = vpack.c.bf16 %v2387, %v2386
        %v2414 = vpack.c.bf16 %v2389, %v2388
        %v2415 = vpack.c.bf16 %v2391, %v2390
        %v2416 = vld [vmem:[%s5] sm:$0xff]
        %v2417 = vld [vmem:[%s5 + $0x8] sm:$0xff]
        %v2418 = vld [vmem:[%s5 + $0x10] sm:$0xff]
        %v2419 = vld [vmem:[%s5 + $0x18] sm:$0xff]
        %v2420 = vld [vmem:[%s5 + $0x20] sm:$0xff]
        %v2421 = vld [vmem:[%s5 + $0x28] sm:$0xff]
        %v2422 = vld [vmem:[%s5 + $0x30] sm:$0xff]
        %v2423 = vld [vmem:[%s5 + $0x38] sm:$0xff]
        %v2424 = vld [vmem:[%s5 + $0x40] sm:$0xff]
        %v2425 = vld [vmem:[%s5 + $0x48] sm:$0xff]
        %v2426 = vld [vmem:[%s5 + $0x50] sm:$0xff]
        %v2427 = vld [vmem:[%s5 + $0x58] sm:$0xff]
        %v2428 = vld [vmem:[%s5 + $0x60] sm:$0xff]
        %v2429 = vld [vmem:[%s5 + $0x68] sm:$0xff]
        %v2430 = vld [vmem:[%s5 + $0x70] sm:$0xff]
        %v2431 = vld [vmem:[%s5 + $0x78] sm:$0xff]
        %2433 = vset.pattern.permute.xlu0 0
        %2434 = vperm.xlu0 %2433, %v2416
        %v2435 = vpop.permute.xlu0 %2434
        %2438 = vset.pattern.permute.xlu0 0
        %2439 = vperm.xlu0 %2438, %v2417
        %v2440 = vpop.permute.xlu0 %2439
        %2443 = vset.pattern.permute.xlu0 0
        %2444 = vperm.xlu0 %2443, %v2418
        %v2445 = vpop.permute.xlu0 %2444
        %2448 = vset.pattern.permute.xlu0 0
        %2449 = vperm.xlu0 %2448, %v2419
        %v2450 = vpop.permute.xlu0 %2449
        %2453 = vset.pattern.permute.xlu0 0
        %2454 = vperm.xlu0 %2453, %v2420
        %v2455 = vpop.permute.xlu0 %2454
        %2458 = vset.pattern.permute.xlu0 0
        %2459 = vperm.xlu0 %2458, %v2421
        %v2460 = vpop.permute.xlu0 %2459
        %2463 = vset.pattern.permute.xlu0 0
        %2464 = vperm.xlu0 %2463, %v2422
        %v2465 = vpop.permute.xlu0 %2464
        %2468 = vset.pattern.permute.xlu0 0
        %2469 = vperm.xlu0 %2468, %v2423
        %v2470 = vpop.permute.xlu0 %2469
        %2473 = vset.pattern.permute.xlu0 0
        %2474 = vperm.xlu0 %2473, %v2424
        %v2475 = vpop.permute.xlu0 %2474
        %2478 = vset.pattern.permute.xlu0 0
        %2479 = vperm.xlu0 %2478, %v2425
        %v2480 = vpop.permute.xlu0 %2479
        %2483 = vset.pattern.permute.xlu0 0
        %2484 = vperm.xlu0 %2483, %v2426
        %v2485 = vpop.permute.xlu0 %2484
        %2488 = vset.pattern.permute.xlu0 0
        %2489 = vperm.xlu0 %2488, %v2427
        %v2490 = vpop.permute.xlu0 %2489
        %2493 = vset.pattern.permute.xlu0 0
        %2494 = vperm.xlu0 %2493, %v2428
        %v2495 = vpop.permute.xlu0 %2494
        %2498 = vset.pattern.permute.xlu0 0
        %2499 = vperm.xlu0 %2498, %v2429
        %v2500 = vpop.permute.xlu0 %2499
        %2503 = vset.pattern.permute.xlu0 0
        %2504 = vperm.xlu0 %2503, %v2430
        %v2505 = vpop.permute.xlu0 %2504
        %2508 = vset.pattern.permute.xlu0 0
        %2509 = vperm.xlu0 %2508, %v2431
        %v2510 = vpop.permute.xlu0 %2509
        %v2528 = vunpack.c.l.b16 %v2392
        %v2529 = vunpack.c.l.b16 %v2393
        %v2530 = vunpack.c.l.b16 %v2394
        %v2531 = vunpack.c.l.b16 %v2395
        %v2532 = vunpack.c.l.b16 %v2396
        %v2533 = vunpack.c.l.b16 %v2397
        %v2534 = vunpack.c.l.b16 %v2398
        %v2535 = vunpack.c.l.b16 %v2399
        %v2536 = vunpack.c.l.b16 %v2400
        %v2537 = vunpack.c.l.b16 %v2401
        %v2538 = vunpack.c.l.b16 %v2402
        %v2539 = vunpack.c.l.b16 %v2403
        %v2540 = vunpack.c.l.b16 %v2404
        %v2541 = vunpack.c.l.b16 %v2405
        %v2542 = vunpack.c.l.b16 %v2406
        %v2543 = vunpack.c.l.b16 %v2407
        %v2544 = vpack.c.b16 %v2529, %v2528
        %v2545 = vpack.c.b16 %v2531, %v2530
        %v2546 = vpack.c.b16 %v2533, %v2532
        %v2547 = vpack.c.b16 %v2535, %v2534
        %v2548 = vpack.c.b16 %v2537, %v2536
        %v2549 = vpack.c.b16 %v2539, %v2538
        %v2550 = vpack.c.b16 %v2541, %v2540
        %v2551 = vpack.c.b16 %v2543, %v2542
        %2560 = vmatpush.bf16.msra.mxu0 %v2415
        %2561 = vmatpush.bf16.msra.mxu0 %v2414
        %2562 = vmatpush.bf16.msra.mxu0 %v2413
        %2563 = vmatpush.bf16.msra.mxu0 %v2412
        %2564 = vmatpush.bf16.msra.mxu0 %v2411
        %2565 = vmatpush.bf16.msra.mxu0 %v2410
        %2566 = vmatpush.bf16.msra.mxu0 %v2409
        %2567 = vmatpush.bf16.msra.mxu0 %v2408
        %2568 = vmatmul.bf16.gmra.mxu0 %v2544
        %v2569 = vpop.f32.mrf.mxu0
        %v2570 = vadd.f32 %v2435, %v2569
        %v2571 = vpop.f32.mrf.mxu0
        %v2572 = vadd.f32 %v2440, %v2571
        %2573 = vmatmul.bf16.gmra.mxu0 %v2545
        %v2574 = vpop.f32.mrf.mxu0
        %v2575 = vadd.f32 %v2445, %v2574
        %v2576 = vpop.f32.mrf.mxu0
        %v2577 = vadd.f32 %v2450, %v2576
        %2578 = vmatmul.bf16.gmra.mxu0 %v2546
        %v2579 = vpop.f32.mrf.mxu0
        %v2580 = vadd.f32 %v2455, %v2579
        %v2581 = vpop.f32.mrf.mxu0
        %v2582 = vadd.f32 %v2460, %v2581
        %2583 = vmatmul.bf16.gmra.mxu0 %v2547
        %v2584 = vpop.f32.mrf.mxu0
        %v2585 = vadd.f32 %v2465, %v2584
        %v2586 = vpop.f32.mrf.mxu0
        %v2587 = vadd.f32 %v2470, %v2586
        %2588 = vmatmul.bf16.gmra.mxu0 %v2548
        %v2589 = vpop.f32.mrf.mxu0
        %v2590 = vadd.f32 %v2475, %v2589
        %v2591 = vpop.f32.mrf.mxu0
        %v2592 = vadd.f32 %v2480, %v2591
        %2593 = vmatmul.bf16.gmra.mxu0 %v2549
        %v2594 = vpop.f32.mrf.mxu0
        %v2595 = vadd.f32 %v2485, %v2594
        %v2596 = vpop.f32.mrf.mxu0
        %v2597 = vadd.f32 %v2490, %v2596
        %2598 = vmatmul.bf16.gmra.mxu0 %v2550
        %v2599 = vpop.f32.mrf.mxu0
        %v2600 = vadd.f32 %v2495, %v2599
        %v2601 = vpop.f32.mrf.mxu0
        %v2602 = vadd.f32 %v2500, %v2601
        %2603 = vmatmul.bf16.gmra.mxu0 %v2551
        %v2604 = vpop.f32.mrf.mxu0
        %v2605 = vadd.f32 %v2505, %v2604
        %v2606 = vpop.f32.mrf.mxu0
        %v2607 = vadd.f32 %v2510, %v2606
        %2608 = vdwg.mxu0
        %v2609 = vmax.f32 %v2570, 0.0
        %v2610 = vmax.f32 %v2572, 0.0
        %v2611 = vmax.f32 %v2575, 0.0
        %v2612 = vmax.f32 %v2577, 0.0
        %v2613 = vmax.f32 %v2580, 0.0
        %v2614 = vmax.f32 %v2582, 0.0
        %v2615 = vmax.f32 %v2585, 0.0
        %v2616 = vmax.f32 %v2587, 0.0
        %v2617 = vmax.f32 %v2590, 0.0
        %v2618 = vmax.f32 %v2592, 0.0
        %v2619 = vmax.f32 %v2595, 0.0
        %v2620 = vmax.f32 %v2597, 0.0
        %v2621 = vmax.f32 %v2600, 0.0
        %v2622 = vmax.f32 %v2602, 0.0
        %v2623 = vmax.f32 %v2605, 0.0
        %v2624 = vmax.f32 %v2607, 0.0
        %v2625 = vld [vmem:[%s6] sm:$0x3]
        %v2626 = vpack.c.bf16 %v2610, %v2609
        %v2627 = vpack.c.bf16 %v2612, %v2611
        %v2628 = vpack.c.bf16 %v2614, %v2613
        %v2629 = vpack.c.bf16 %v2616, %v2615
        %v2630 = vpack.c.bf16 %v2618, %v2617
        %v2631 = vpack.c.bf16 %v2620, %v2619
        %v2632 = vpack.c.bf16 %v2622, %v2621
        %v2633 = vpack.c.bf16 %v2624, %v2623
        %v2634 = vld [vmem:[%s7] sm:$0x7]
        %2636 = vset.pattern.permute.xlu0 0
        %2637 = vperm.xlu0 %2636, %v2634
        %v2638 = vpop.permute.xlu0 %2637
        %2640 = vmatpush.bf16.msra.mxu0 %v2633
        %2641 = vmatpush.bf16.msra.mxu0 %v2632
        %2642 = vmatpush.bf16.msra.mxu0 %v2631
        %2643 = vmatpush.bf16.msra.mxu0 %v2630
        %2644 = vmatpush.bf16.msra.mxu0 %v2629
        %2645 = vmatpush.bf16.msra.mxu0 %v2628
        %2646 = vmatpush.bf16.msra.mxu0 %v2627
        %2647 = vmatpush.bf16.msra.mxu0 %v2626
        %2648 = vmatmul.bf16.gmra.mxu0 %v2625
        %v2649 = vpop.f32.mrf.mxu0
        %v2650 = vadd.f32 %v2638, %v2649
        %v2651 = vpop.f32.mrf.mxu0
        %2652 = vdwg.mxu0
        %v2653 = vxor.u32 %v2650, 2147483648
        %v2654 = vmul.f32 %v2653, 1.442695
        %v2655 = vpow.pop %v2654
        %v2656 = vadd.f32 %v2655, 1.0
        %v2657 = vrcp.pop %v2656
        %v2658 = vmul.f32 %v2656, %v2657
        %v2659 = vsub.f32 1.0, %v2658
        %v2660 = vmul.f32 %v2657, %v2659
        %v2661 = vadd.f32 %v2657, %v2660
        %vm2662 = vweird.f32 %v2656
        %vm2663 = vweird.f32 %v2657
        %vm2664 = vmor %vm2662, %vm2663
        %v2665 = vsel %vm2664, %v2657, %v2661
        %v2666 = vand.u32 2147483647, %v2656
        %vm2667 = vcmp.eq.f32.partialorder %v2666, 8.507059e+37
        %v2668 = vand.u32 %v2656, 2147483648
        %v2669 = vor.u32 1.1754944e-38, %v2668
        %v2670 = vsel %vm2667, %v2669, %v2665
        %v2671 = vmul.f32 1.0, %v2670
        %2672 = vst [vmem:[%s296] sm:$0x7] %v2671
        %s2673 = sand.u32 %s203, 1
        %s2674 = scalar_lea.sflag [#allocation3], %s2673
        %s2675 = sand.u32 %s203, 1
        %s2676 = smul.addr %s2675, 4
        %s2677 = scalar_lea.vmem [#allocation2], %s2676
        // Predicated region
        $region53: #{tpu_custom_call.1} parent=51 // pred_check
          %p2678 = pneg %p213
        $region54: #{tpu_custom_call.1} parent=51 // pred_check_branch
          %2680 = sbr.rel (%p2678) target = $region56
        $region55: #{tpu_custom_call.1} parent=51 // pred_region
          %2682 = vsyncadd %s2674, 0
          %s2683 = smul.addr %s22, 4
          %s2684 = scalar_lea.hbm %s8, %s2683
          %s2686 = sshll.u32 %s2677, 4
          %s2687 = int_to_ptr.vmem [resolvable:$true] %s2686
          %s2688 = sshll.u32 %s2684, 4
          %s2689 = int_to_ptr.hbm [resolvable:$true] %s2688
          %2691 = dma.vmem_to_hbm [thread:$0]  %s2687, 64, %s2689, %s2674
        $region56: #{tpu_custom_call.1} parent=51 // pred_fallthru
          _
      $region52: #{tpu_custom_call.1} parent=5 // pred_fallthru
        _
      %p2692 = scmp.le.s32.totalorder 2, %s17
      // Predicated region
      $region57: #{tpu_custom_call.1} parent=5 // pred_check
        %p2693 = pneg %p2692
      $region58: #{tpu_custom_call.1} parent=5 // pred_check_branch
        %2695 = sbr.rel (%p2693) target = $region60
      $region59: #{tpu_custom_call.1} parent=5 // pred_region
        %s2696 = ssub.s32 %s17, 2
        // Predicated region
        $region61: #{tpu_custom_call.1} parent=59 // pred_check
          %p2697 = pneg %p219
        $region62: #{tpu_custom_call.1} parent=59 // pred_check_branch
          %2699 = sbr.rel (%p2697) target = $region64
        $region63: #{tpu_custom_call.1} parent=59 // pred_region
          %s2700 = sand.u32 %s204, 1
          %s2701 = scalar_lea.sflag [#allocation3], %s2700
          %s2702 = sand.u32 %s204, 1
          %s2703 = smul.addr %s2702, 4
          %s2704 = scalar_lea.vmem [#allocation2], %s2703
          %2706 = dma.done %s2701, 64
        $region64: #{tpu_custom_call.1} parent=59 // pred_fallthru
          _
      $region60: #{tpu_custom_call.1} parent=5 // pred_fallthru
        _
    $region6: #{tpu_custom_call.1} parent=1 // loop_footer
      %s21 = sadd.s32 1, %s17
    $region7: #{tpu_custom_call.1} parent=1 // loop_footer_branch
      %16 = sbr.rel target = $region3
    $region8: #{tpu_custom_call.1} parent=1 // loop_exit
      _
    %2707 = vsyncpa [#allocation3], 1
    %s2708 = scalar_lea.sflag [#allocation3], 1
    %2709 = vsyncpa %s2708, 1

</llo_original>
